<compile_context>
chip_gen: v7x
topology: tpu7x:2x2x1
jax: 0.10.0
libtpu: 0.0.40
codegen_flags: <defaults>
</compile_context>

<pallas_src>
import jax
import jax.numpy as jnp
from jax import lax
from jax.experimental import pallas as pl
from jax.experimental.pallas import tpu as pltpu

BN_EPS = 1e-5
AUX_WIDTH = 512   # widest hidden layer; lane width of the packed aux buffer
AUX_ROWS = 16     # 5 layers * 3 rows (bias, gamma, beta) + 1 row for fc6 bias
OUT_PAD = 128     # lane-dense padding for the final 64 -> 1 layer


def _relu_bn(h, gamma, beta):
    """ReLU -> training-mode BatchNorm1d as a fused affine (f32 throughout)."""
    h = jnp.maximum(h, 0.0)
    mean = jnp.mean(h, axis=0, keepdims=True)                      # [1, N]
    var = jnp.mean(h * h, axis=0, keepdims=True) - mean * mean     # biased, one-pass
    scale = gamma * lax.rsqrt(var + BN_EPS)                        # [1, N]
    shift = beta - mean * scale                                    # [1, N]
    return h * scale + shift


def mlp_kernel(x_ref, w1_ref, w2_ref, w3_ref, w4_ref, w5_ref, w6_ref,
               aux_ref, o_ref):
    h = x_ref[...]  # f32 [B, F]

    def dense_relu_bn(h, w_ref, layer_idx, n):
        r = 3 * layer_idx
        b = aux_ref[r:r + 1, 0:n]        # [1, n] static slices from packed aux
        g = aux_ref[r + 1:r + 2, 0:n]
        be = aux_ref[r + 2:r + 3, 0:n]
        z = jnp.dot(h.astype(jnp.bfloat16), w_ref[...],
                    preferred_element_type=jnp.float32) + b
        return _relu_bn(z, g, be)

    h = dense_relu_bn(h, w1_ref, 0, 256)   # fc1 -> relu -> bn1 (dropout=identity)
    h = dense_relu_bn(h, w2_ref, 1, 512)   # fc2 -> relu -> bn2
    h = dense_relu_bn(h, w3_ref, 2, 256)   # fc3 -> relu -> bn3
    h = dense_relu_bn(h, w4_ref, 3, 128)   # fc4 -> relu -> bn4
    h = dense_relu_bn(h, w5_ref, 4, 64)    # fc5 -> relu -> bn5

    # fc6 (lane-dense: 64 -> 128 padded; real output is column 0)
    b6 = aux_ref[15:16, 0:OUT_PAD]
    o_ref[...] = jnp.dot(h.astype(jnp.bfloat16), w6_ref[...],
                         preferred_element_type=jnp.float32) + b6


def init_params(key, input_size):
    """Deterministic, PyTorch-shaped parameters (weights stored (in, out))."""
    dims = [input_size, 256, 512, 256, 128, 64, 1]
    params = []
    for i in range(6):
        key, kw, kb = jax.random.split(key, 3)
        fan_in, fan_out = dims[i], dims[i + 1]
        bound = 1.0 / jnp.sqrt(fan_in)
        w = jax.random.uniform(kw, (fan_in, fan_out), jnp.float32, -bound, bound)
        b = jax.random.uniform(kb, (1, fan_out), jnp.float32, -bound, bound)
        params.append((w, b))
    # BatchNorm1d defaults: gamma = 1, beta = 0 for the first 5 layer widths
    bn_params = [
        (jnp.ones((1, d), jnp.float32), jnp.zeros((1, d), jnp.float32))
        for d in dims[1:6]
    ]
    return params, bn_params


def _pack_aux(params, bn_params):
    """Pack bias/gamma/beta of layers 1-5 and the fc6 bias into one buffer."""
    aux = jnp.zeros((AUX_ROWS, AUX_WIDTH), jnp.float32)
    for i in range(5):
        _, b = params[i]
        g, be = bn_params[i]
        n = b.shape[1]
        aux = aux.at[3 * i, :n].set(b[0])
        aux = aux.at[3 * i + 1, :n].set(g[0])
        aux = aux.at[3 * i + 2, :n].set(be[0])
    aux = aux.at[15, 0].set(params[5][1][0, 0])
    return aux


def neural_net_forward(x, params, bn_params):
    B = x.shape[0]

    # bf16 weights; pad the final (64, 1) weight to (64, 128) for a lane-dense
    # output layout.
    ws = [params[i][0].astype(jnp.bfloat16) for i in range(5)]
    w6p = (jnp.zeros((64, OUT_PAD), jnp.float32)
           .at[:, :1].set(params[5][0])
           .astype(jnp.bfloat16))
    aux = _pack_aux(params, bn_params)

    vmem = pl.BlockSpec(memory_space=pltpu.MemorySpace.VMEM)
    out_padded = pl.pallas_call(
        mlp_kernel,
        out_shape=jax.ShapeDtypeStruct((B, OUT_PAD), jnp.float32),
        in_specs=[vmem] * 8,
        out_specs=vmem,
    )(x, *ws, w6p, aux)
    return out_padded[:, :1]


def _reference_forward(x, params, bn_params):
    """Pure-JAX reference mirroring the kernel's bf16-operand / f32-accum math."""
    h = x
    for i in range(5):
        w, b = params[i]
        g, be = bn_params[i]
        z = jnp.dot(h.astype(jnp.bfloat16), w.astype(jnp.bfloat16),
                    preferred_element_type=jnp.float32) + b
        z = jnp.maximum(z, 0.0)
        mean = jnp.mean(z, axis=0, keepdims=True)
        var = jnp.mean((z - mean) ** 2, axis=0, keepdims=True)
        h = (z - mean) * lax.rsqrt(var + BN_EPS) * g + be
    w6, b6 = params[5]
    return jnp.dot(h.astype(jnp.bfloat16), w6.astype(jnp.bfloat16),
                   preferred_element_type=jnp.float32) + b6


if __name__ == "__main__":
    INPUT_SIZE = 32
    BATCH = 8

    key = jax.random.PRNGKey(0)
    key, kx = jax.random.split(key)
    x = jax.random.normal(kx, (BATCH, INPUT_SIZE), jnp.float32)

    params, bn_params = init_params(key, INPUT_SIZE)

    out = neural_net_forward(x, params, bn_params)
    out = jax.block_until_ready(out)

    assert out.shape == (BATCH, 1), out.shape
    assert bool(jnp.all(jnp.isfinite(out)))

    ref = _reference_forward(x, params, bn_params)
    assert bool(jnp.allclose(out, ref, atol=2e-2, rtol=2e-2)), (out, ref)

    print("KERNEL_OK")
</pallas_src>

<mosaic_0001>
module attributes {stable_mosaic.version = 11 : i64} {
  func.func @mlp_kernel(%arg0: memref<8x32xf32, #tpu.memory_space<vmem>>, %arg1: memref<32x256xbf16, #tpu.memory_space<vmem>>, %arg2: memref<256x512xbf16, #tpu.memory_space<vmem>>, %arg3: memref<512x256xbf16, #tpu.memory_space<vmem>>, %arg4: memref<256x128xbf16, #tpu.memory_space<vmem>>, %arg5: memref<128x64xbf16, #tpu.memory_space<vmem>>, %arg6: memref<64x128xbf16, #tpu.memory_space<vmem>>, %arg7: memref<16x512xf32, #tpu.memory_space<vmem>>, %arg8: memref<8x128xf32, #tpu.memory_space<vmem>>) attributes {dimension_semantics = [], scalar_prefetch = 0 : i64, scratch_operands = 0 : i64, tpu.core_type = #tpu.core_type<tc>} {
    %c0 = arith.constant 0 : index
    %c0_0 = arith.constant 0 : index
    %0 = vector.load %arg0[%c0, %c0_0] : memref<8x32xf32, #tpu.memory_space<vmem>>, vector<8x32xf32>
    %c0_1 = arith.constant 0 : index
    %c0_2 = arith.constant 0 : index
    %1 = vector.load %arg7[%c0_1, %c0_2] : memref<16x512xf32, #tpu.memory_space<vmem>>, vector<1x256xf32>
    %c1 = arith.constant 1 : index
    %c0_3 = arith.constant 0 : index
    %2 = vector.load %arg7[%c1, %c0_3] : memref<16x512xf32, #tpu.memory_space<vmem>>, vector<1x256xf32>
    %c2 = arith.constant 2 : index
    %c0_4 = arith.constant 0 : index
    %3 = vector.load %arg7[%c2, %c0_4] : memref<16x512xf32, #tpu.memory_space<vmem>>, vector<1x256xf32>
    %4 = arith.truncf %0 : vector<8x32xf32> to vector<8x32xbf16>
    %c0_5 = arith.constant 0 : index
    %c0_6 = arith.constant 0 : index
    %5 = vector.load %arg1[%c0_5, %c0_6] : memref<32x256xbf16, #tpu.memory_space<vmem>>, vector<32x256xbf16>
    %cst = arith.constant dense<0.000000e+00> : vector<8x256xf32>
    %6 = tpu.matmul %4, %5, %cst {dimension_numbers = #tpu.dot_dimension_numbers<[1], [0], [0], [1], [0, 0, 1, 1], [], []>} : vector<8x32xbf16>, vector<32x256xbf16>, vector<8x256xf32> -> vector<8x256xf32>
    %7 = vector.broadcast %1 : vector<1x256xf32> to vector<8x256xf32>
    %8 = arith.addf %6, %7 : vector<8x256xf32>
    %cst_7 = arith.constant 0.000000e+00 : f32
    %9 = vector.broadcast %cst_7 : f32 to vector<8x256xf32>
    %10 = arith.maximumf %8, %9 : vector<8x256xf32>
    %cst_8 = arith.constant dense<0.000000e+00> : vector<256xf32>
    %11 = vector.multi_reduction <add>, %10, %cst_8 [0] : vector<8x256xf32> to vector<256xf32>
    %12 = vector.shape_cast %11 : vector<256xf32> to vector<1x256xf32>
    %cst_9 = arith.constant 8.000000e+00 : f32
    %13 = vector.broadcast %cst_9 : f32 to vector<1x256xf32>
    %14 = arith.divf %12, %13 : vector<1x256xf32>
    %15 = arith.mulf %10, %10 : vector<8x256xf32>
    %cst_10 = arith.constant dense<0.000000e+00> : vector<256xf32>
    %16 = vector.multi_reduction <add>, %15, %cst_10 [0] : vector<8x256xf32> to vector<256xf32>
    %17 = vector.shape_cast %16 : vector<256xf32> to vector<1x256xf32>
    %cst_11 = arith.constant 8.000000e+00 : f32
    %18 = vector.broadcast %cst_11 : f32 to vector<1x256xf32>
    %19 = arith.divf %17, %18 : vector<1x256xf32>
    %20 = arith.mulf %14, %14 : vector<1x256xf32>
    %21 = arith.subf %19, %20 : vector<1x256xf32>
    %cst_12 = arith.constant 9.99999974E-6 : f32
    %22 = vector.broadcast %cst_12 : f32 to vector<1x256xf32>
    %23 = arith.addf %21, %22 : vector<1x256xf32>
    %24 = math.rsqrt %23 : vector<1x256xf32>
    %25 = arith.mulf %2, %24 : vector<1x256xf32>
    %26 = arith.mulf %14, %25 : vector<1x256xf32>
    %27 = arith.subf %3, %26 : vector<1x256xf32>
    %28 = vector.broadcast %25 : vector<1x256xf32> to vector<8x256xf32>
    %29 = arith.mulf %10, %28 : vector<8x256xf32>
    %30 = vector.broadcast %27 : vector<1x256xf32> to vector<8x256xf32>
    %31 = arith.addf %29, %30 : vector<8x256xf32>
    %c3 = arith.constant 3 : index
    %c0_13 = arith.constant 0 : index
    %32 = vector.load %arg7[%c3, %c0_13] : memref<16x512xf32, #tpu.memory_space<vmem>>, vector<1x512xf32>
    %c4 = arith.constant 4 : index
    %c0_14 = arith.constant 0 : index
    %33 = vector.load %arg7[%c4, %c0_14] : memref<16x512xf32, #tpu.memory_space<vmem>>, vector<1x512xf32>
    %c5 = arith.constant 5 : index
    %c0_15 = arith.constant 0 : index
    %34 = vector.load %arg7[%c5, %c0_15] : memref<16x512xf32, #tpu.memory_space<vmem>>, vector<1x512xf32>
    %35 = arith.truncf %31 : vector<8x256xf32> to vector<8x256xbf16>
    %c0_16 = arith.constant 0 : index
    %c0_17 = arith.constant 0 : index
    %36 = vector.load %arg2[%c0_16, %c0_17] : memref<256x512xbf16, #tpu.memory_space<vmem>>, vector<256x512xbf16>
    %cst_18 = arith.constant dense<0.000000e+00> : vector<8x512xf32>
    %37 = tpu.matmul %35, %36, %cst_18 {dimension_numbers = #tpu.dot_dimension_numbers<[1], [0], [0], [1], [0, 0, 1, 1], [], []>} : vector<8x256xbf16>, vector<256x512xbf16>, vector<8x512xf32> -> vector<8x512xf32>
    %38 = vector.broadcast %32 : vector<1x512xf32> to vector<8x512xf32>
    %39 = arith.addf %37, %38 : vector<8x512xf32>
    %cst_19 = arith.constant 0.000000e+00 : f32
    %40 = vector.broadcast %cst_19 : f32 to vector<8x512xf32>
    %41 = arith.maximumf %39, %40 : vector<8x512xf32>
    %cst_20 = arith.constant dense<0.000000e+00> : vector<512xf32>
    %42 = vector.multi_reduction <add>, %41, %cst_20 [0] : vector<8x512xf32> to vector<512xf32>
    %43 = vector.shape_cast %42 : vector<512xf32> to vector<1x512xf32>
    %cst_21 = arith.constant 8.000000e+00 : f32
    %44 = vector.broadcast %cst_21 : f32 to vector<1x512xf32>
    %45 = arith.divf %43, %44 : vector<1x512xf32>
    %46 = arith.mulf %41, %41 : vector<8x512xf32>
    %cst_22 = arith.constant dense<0.000000e+00> : vector<512xf32>
    %47 = vector.multi_reduction <add>, %46, %cst_22 [0] : vector<8x512xf32> to vector<512xf32>
    %48 = vector.shape_cast %47 : vector<512xf32> to vector<1x512xf32>
    %cst_23 = arith.constant 8.000000e+00 : f32
    %49 = vector.broadcast %cst_23 : f32 to vector<1x512xf32>
    %50 = arith.divf %48, %49 : vector<1x512xf32>
    %51 = arith.mulf %45, %45 : vector<1x512xf32>
    %52 = arith.subf %50, %51 : vector<1x512xf32>
    %cst_24 = arith.constant 9.99999974E-6 : f32
    %53 = vector.broadcast %cst_24 : f32 to vector<1x512xf32>
    %54 = arith.addf %52, %53 : vector<1x512xf32>
    %55 = math.rsqrt %54 : vector<1x512xf32>
    %56 = arith.mulf %33, %55 : vector<1x512xf32>
    %57 = arith.mulf %45, %56 : vector<1x512xf32>
    %58 = arith.subf %34, %57 : vector<1x512xf32>
    %59 = vector.broadcast %56 : vector<1x512xf32> to vector<8x512xf32>
    %60 = arith.mulf %41, %59 : vector<8x512xf32>
    %61 = vector.broadcast %58 : vector<1x512xf32> to vector<8x512xf32>
    %62 = arith.addf %60, %61 : vector<8x512xf32>
    %c6 = arith.constant 6 : index
    %c0_25 = arith.constant 0 : index
    %63 = vector.load %arg7[%c6, %c0_25] : memref<16x512xf32, #tpu.memory_space<vmem>>, vector<1x256xf32>
    %c7 = arith.constant 7 : index
    %c0_26 = arith.constant 0 : index
    %64 = vector.load %arg7[%c7, %c0_26] : memref<16x512xf32, #tpu.memory_space<vmem>>, vector<1x256xf32>
    %c8 = arith.constant 8 : index
    %c0_27 = arith.constant 0 : index
    %65 = vector.load %arg7[%c8, %c0_27] : memref<16x512xf32, #tpu.memory_space<vmem>>, vector<1x256xf32>
    %66 = arith.truncf %62 : vector<8x512xf32> to vector<8x512xbf16>
    %c0_28 = arith.constant 0 : index
    %c0_29 = arith.constant 0 : index
    %67 = vector.load %arg3[%c0_28, %c0_29] : memref<512x256xbf16, #tpu.memory_space<vmem>>, vector<512x256xbf16>
    %cst_30 = arith.constant dense<0.000000e+00> : vector<8x256xf32>
    %68 = tpu.matmul %66, %67, %cst_30 {dimension_numbers = #tpu.dot_dimension_numbers<[1], [0], [0], [1], [0, 0, 1, 1], [], []>} : vector<8x512xbf16>, vector<512x256xbf16>, vector<8x256xf32> -> vector<8x256xf32>
    %69 = vector.broadcast %63 : vector<1x256xf32> to vector<8x256xf32>
    %70 = arith.addf %68, %69 : vector<8x256xf32>
    %cst_31 = arith.constant 0.000000e+00 : f32
    %71 = vector.broadcast %cst_31 : f32 to vector<8x256xf32>
    %72 = arith.maximumf %70, %71 : vector<8x256xf32>
    %cst_32 = arith.constant dense<0.000000e+00> : vector<256xf32>
    %73 = vector.multi_reduction <add>, %72, %cst_32 [0] : vector<8x256xf32> to vector<256xf32>
    %74 = vector.shape_cast %73 : vector<256xf32> to vector<1x256xf32>
    %cst_33 = arith.constant 8.000000e+00 : f32
    %75 = vector.broadcast %cst_33 : f32 to vector<1x256xf32>
    %76 = arith.divf %74, %75 : vector<1x256xf32>
    %77 = arith.mulf %72, %72 : vector<8x256xf32>
    %cst_34 = arith.constant dense<0.000000e+00> : vector<256xf32>
    %78 = vector.multi_reduction <add>, %77, %cst_34 [0] : vector<8x256xf32> to vector<256xf32>
    %79 = vector.shape_cast %78 : vector<256xf32> to vector<1x256xf32>
    %cst_35 = arith.constant 8.000000e+00 : f32
    %80 = vector.broadcast %cst_35 : f32 to vector<1x256xf32>
    %81 = arith.divf %79, %80 : vector<1x256xf32>
    %82 = arith.mulf %76, %76 : vector<1x256xf32>
    %83 = arith.subf %81, %82 : vector<1x256xf32>
    %cst_36 = arith.constant 9.99999974E-6 : f32
    %84 = vector.broadcast %cst_36 : f32 to vector<1x256xf32>
    %85 = arith.addf %83, %84 : vector<1x256xf32>
    %86 = math.rsqrt %85 : vector<1x256xf32>
    %87 = arith.mulf %64, %86 : vector<1x256xf32>
    %88 = arith.mulf %76, %87 : vector<1x256xf32>
    %89 = arith.subf %65, %88 : vector<1x256xf32>
    %90 = vector.broadcast %87 : vector<1x256xf32> to vector<8x256xf32>
    %91 = arith.mulf %72, %90 : vector<8x256xf32>
    %92 = vector.broadcast %89 : vector<1x256xf32> to vector<8x256xf32>
    %93 = arith.addf %91, %92 : vector<8x256xf32>
    %c9 = arith.constant 9 : index
    %c0_37 = arith.constant 0 : index
    %94 = vector.load %arg7[%c9, %c0_37] : memref<16x512xf32, #tpu.memory_space<vmem>>, vector<1x128xf32>
    %c10 = arith.constant 10 : index
    %c0_38 = arith.constant 0 : index
    %95 = vector.load %arg7[%c10, %c0_38] : memref<16x512xf32, #tpu.memory_space<vmem>>, vector<1x128xf32>
    %c11 = arith.constant 11 : index
    %c0_39 = arith.constant 0 : index
    %96 = vector.load %arg7[%c11, %c0_39] : memref<16x512xf32, #tpu.memory_space<vmem>>, vector<1x128xf32>
    %97 = arith.truncf %93 : vector<8x256xf32> to vector<8x256xbf16>
    %c0_40 = arith.constant 0 : index
    %c0_41 = arith.constant 0 : index
    %98 = vector.load %arg4[%c0_40, %c0_41] : memref<256x128xbf16, #tpu.memory_space<vmem>>, vector<256x128xbf16>
    %cst_42 = arith.constant dense<0.000000e+00> : vector<8x128xf32>
    %99 = tpu.matmul %97, %98, %cst_42 {dimension_numbers = #tpu.dot_dimension_numbers<[1], [0], [0], [1], [0, 0, 1, 1], [], []>} : vector<8x256xbf16>, vector<256x128xbf16>, vector<8x128xf32> -> vector<8x128xf32>
    %100 = vector.broadcast %94 : vector<1x128xf32> to vector<8x128xf32>
    %101 = arith.addf %99, %100 : vector<8x128xf32>
    %cst_43 = arith.constant 0.000000e+00 : f32
    %102 = vector.broadcast %cst_43 : f32 to vector<8x128xf32>
    %103 = arith.maximumf %101, %102 : vector<8x128xf32>
    %cst_44 = arith.constant dense<0.000000e+00> : vector<128xf32>
    %104 = vector.multi_reduction <add>, %103, %cst_44 [0] : vector<8x128xf32> to vector<128xf32>
    %105 = vector.shape_cast %104 : vector<128xf32> to vector<1x128xf32>
    %cst_45 = arith.constant 8.000000e+00 : f32
    %106 = vector.broadcast %cst_45 : f32 to vector<1x128xf32>
    %107 = arith.divf %105, %106 : vector<1x128xf32>
    %108 = arith.mulf %103, %103 : vector<8x128xf32>
    %cst_46 = arith.constant dense<0.000000e+00> : vector<128xf32>
    %109 = vector.multi_reduction <add>, %108, %cst_46 [0] : vector<8x128xf32> to vector<128xf32>
    %110 = vector.shape_cast %109 : vector<128xf32> to vector<1x128xf32>
    %cst_47 = arith.constant 8.000000e+00 : f32
    %111 = vector.broadcast %cst_47 : f32 to vector<1x128xf32>
    %112 = arith.divf %110, %111 : vector<1x128xf32>
    %113 = arith.mulf %107, %107 : vector<1x128xf32>
    %114 = arith.subf %112, %113 : vector<1x128xf32>
    %cst_48 = arith.constant 9.99999974E-6 : f32
    %115 = vector.broadcast %cst_48 : f32 to vector<1x128xf32>
    %116 = arith.addf %114, %115 : vector<1x128xf32>
    %117 = math.rsqrt %116 : vector<1x128xf32>
    %118 = arith.mulf %95, %117 : vector<1x128xf32>
    %119 = arith.mulf %107, %118 : vector<1x128xf32>
    %120 = arith.subf %96, %119 : vector<1x128xf32>
    %121 = vector.broadcast %118 : vector<1x128xf32> to vector<8x128xf32>
    %122 = arith.mulf %103, %121 : vector<8x128xf32>
    %123 = vector.broadcast %120 : vector<1x128xf32> to vector<8x128xf32>
    %124 = arith.addf %122, %123 : vector<8x128xf32>
    %c12 = arith.constant 12 : index
    %c0_49 = arith.constant 0 : index
    %125 = vector.load %arg7[%c12, %c0_49] : memref<16x512xf32, #tpu.memory_space<vmem>>, vector<1x64xf32>
    %c13 = arith.constant 13 : index
    %c0_50 = arith.constant 0 : index
    %126 = vector.load %arg7[%c13, %c0_50] : memref<16x512xf32, #tpu.memory_space<vmem>>, vector<1x64xf32>
    %c14 = arith.constant 14 : index
    %c0_51 = arith.constant 0 : index
    %127 = vector.load %arg7[%c14, %c0_51] : memref<16x512xf32, #tpu.memory_space<vmem>>, vector<1x64xf32>
    %128 = arith.truncf %124 : vector<8x128xf32> to vector<8x128xbf16>
    %c0_52 = arith.constant 0 : index
    %c0_53 = arith.constant 0 : index
    %129 = vector.load %arg5[%c0_52, %c0_53] : memref<128x64xbf16, #tpu.memory_space<vmem>>, vector<128x64xbf16>
    %cst_54 = arith.constant dense<0.000000e+00> : vector<8x64xf32>
    %130 = tpu.matmul %128, %129, %cst_54 {dimension_numbers = #tpu.dot_dimension_numbers<[1], [0], [0], [1], [0, 0, 1, 1], [], []>} : vector<8x128xbf16>, vector<128x64xbf16>, vector<8x64xf32> -> vector<8x64xf32>
    %131 = vector.broadcast %125 : vector<1x64xf32> to vector<8x64xf32>
    %132 = arith.addf %130, %131 : vector<8x64xf32>
    %cst_55 = arith.constant 0.000000e+00 : f32
    %133 = vector.broadcast %cst_55 : f32 to vector<8x64xf32>
    %134 = arith.maximumf %132, %133 : vector<8x64xf32>
    %cst_56 = arith.constant dense<0.000000e+00> : vector<64xf32>
    %135 = vector.multi_reduction <add>, %134, %cst_56 [0] : vector<8x64xf32> to vector<64xf32>
    %136 = vector.shape_cast %135 : vector<64xf32> to vector<1x64xf32>
    %cst_57 = arith.constant 8.000000e+00 : f32
    %137 = vector.broadcast %cst_57 : f32 to vector<1x64xf32>
    %138 = arith.divf %136, %137 : vector<1x64xf32>
    %139 = arith.mulf %134, %134 : vector<8x64xf32>
    %cst_58 = arith.constant dense<0.000000e+00> : vector<64xf32>
    %140 = vector.multi_reduction <add>, %139, %cst_58 [0] : vector<8x64xf32> to vector<64xf32>
    %141 = vector.shape_cast %140 : vector<64xf32> to vector<1x64xf32>
    %cst_59 = arith.constant 8.000000e+00 : f32
    %142 = vector.broadcast %cst_59 : f32 to vector<1x64xf32>
    %143 = arith.divf %141, %142 : vector<1x64xf32>
    %144 = arith.mulf %138, %138 : vector<1x64xf32>
    %145 = arith.subf %143, %144 : vector<1x64xf32>
    %cst_60 = arith.constant 9.99999974E-6 : f32
    %146 = vector.broadcast %cst_60 : f32 to vector<1x64xf32>
    %147 = arith.addf %145, %146 : vector<1x64xf32>
    %148 = math.rsqrt %147 : vector<1x64xf32>
    %149 = arith.mulf %126, %148 : vector<1x64xf32>
    %150 = arith.mulf %138, %149 : vector<1x64xf32>
    %151 = arith.subf %127, %150 : vector<1x64xf32>
    %152 = vector.broadcast %149 : vector<1x64xf32> to vector<8x64xf32>
    %153 = arith.mulf %134, %152 : vector<8x64xf32>
    %154 = vector.broadcast %151 : vector<1x64xf32> to vector<8x64xf32>
    %155 = arith.addf %153, %154 : vector<8x64xf32>
    %c15 = arith.constant 15 : index
    %c0_61 = arith.constant 0 : index
    %156 = vector.load %arg7[%c15, %c0_61] : memref<16x512xf32, #tpu.memory_space<vmem>>, vector<1x128xf32>
    %157 = arith.truncf %155 : vector<8x64xf32> to vector<8x64xbf16>
    %c0_62 = arith.constant 0 : index
    %c0_63 = arith.constant 0 : index
    %158 = vector.load %arg6[%c0_62, %c0_63] : memref<64x128xbf16, #tpu.memory_space<vmem>>, vector<64x128xbf16>
    %cst_64 = arith.constant dense<0.000000e+00> : vector<8x128xf32>
    %159 = tpu.matmul %157, %158, %cst_64 {dimension_numbers = #tpu.dot_dimension_numbers<[1], [0], [0], [1], [0, 0, 1, 1], [], []>} : vector<8x64xbf16>, vector<64x128xbf16>, vector<8x128xf32> -> vector<8x128xf32>
    %160 = vector.broadcast %156 : vector<1x128xf32> to vector<8x128xf32>
    %161 = arith.addf %159, %160 : vector<8x128xf32>
    %c0_65 = arith.constant 0 : index
    %c0_66 = arith.constant 0 : index
    %162 = vector.load %arg8[%c0_65, %c0_66] : memref<8x128xf32, #tpu.memory_space<vmem>>, vector<8x128xf32>
    tpu.vector_store %arg8[%c0_65, %c0_66], %161 {strides = array<i32>} : memref<8x128xf32, #tpu.memory_space<vmem>>, vector<8x128xf32>,
    return
  }
}

</mosaic_0001>

<llo_original>
// kernel: tpu_custom_call.1
$region0: #{tpu_custom_call.1}
  #allocation0 [shape = 'u32[]', space=smem, size = 0x4, offset = 0x4, fixed_abs, tag = 'smem constant byte address 0x4 - core index']
  #allocation1 [shape = 'u32[144,128]{1,0:T(1,128)}', space=vmem, size = 0x12000, scoped, tag = 'internal scratch']
  %s0 = inlined_call_operand.vmem [shape: f32[8,32], index: 0, kind: input, shape index: {}]
  %s1 = inlined_call_operand.vmem [shape: bf16[32,256], index: 1, kind: input, shape index: {}]
  %s2 = inlined_call_operand.hbm [shape: bf16[256,512], index: 2, kind: input, shape index: {}]
  %s3 = inlined_call_operand.hbm [shape: bf16[512,256], index: 3, kind: input, shape index: {}]
  %s4 = inlined_call_operand.hbm [shape: bf16[256,128], index: 4, kind: input, shape index: {}]
  %s5 = inlined_call_operand.vmem [shape: bf16[128,64], index: 5, kind: input, shape index: {}]
  %s6 = inlined_call_operand.hbm [shape: bf16[64,128], index: 6, kind: input, shape index: {}]
  %s7 = inlined_call_operand.vmem [shape: f32[16,512], index: 7, kind: input, shape index: {}]
  %s8 = inlined_call_operand.hbm [shape: f32[8,128], index: 8, kind: output, shape index: {}]
  %s9 = sld [smem:[#allocation0]]
  $region58: #{tpu_custom_call.1} parent=0
    _
  %s11 = ssub.s32 1, %s9
  %s12 = scalar_select 0, %s11, %s9
  $region1: #{tpu_custom_call.1} parent=0
    #allocation2 [shape = 'u8[262144]{0}', space=vmem, size = 0x40000, scoped, tag = 'input window, operand 2, single buffered']
    #allocation3 [shape = 's32[1]{0}', space=sflag, size = 0x4, scoped, tag = 'scoped memory for tpu_custom_call.1']
    #allocation4 [shape = 's32[1]{0}', space=sflag, size = 0x4, scoped, tag = 'scoped memory for tpu_custom_call.1']
    #allocation5 [shape = 'u8[262144]{0}', space=vmem, size = 0x40000, scoped, tag = 'input window, operand 3, single buffered']
    #allocation6 [shape = 's32[1]{0}', space=sflag, size = 0x4, scoped, tag = 'scoped memory for tpu_custom_call.1']
    #allocation7 [shape = 'u8[65536]{0}', space=vmem, size = 0x10000, scoped, tag = 'input window, operand 4, single buffered']
    #allocation8 [shape = 'u8[16384]{0}', space=vmem, size = 0x4000, scoped, tag = 'input window, operand 6, single buffered']
    #allocation9 [shape = 's32[1]{0}', space=sflag, size = 0x4, scoped, tag = 'scoped memory for tpu_custom_call.1']
    #allocation10 [shape = 'u8[4096]{0}', space=vmem, size = 0x1000, scoped, tag = 'output window, operand 0, single buffered']
    %13 = vsyncpa [#allocation3], 0
    %14 = vsyncpa [#allocation6], 0
    %15 = vsyncpa [#allocation9], 0
    %16 = vsyncpa [#allocation4], 0
    // Predicated region
    $region2: #{tpu_custom_call.1} parent=1 // pred_check
      _
    $region3: #{tpu_custom_call.1} parent=1 // pred_check_branch
      %18 = sbr.rel (0) target = $region5
    $region4: #{tpu_custom_call.1} parent=1 // pred_region
      _
    $region5: #{tpu_custom_call.1} parent=1 // pred_fallthru
      _
    // Predicated region
    $region6: #{tpu_custom_call.1} parent=1 // pred_check
      _
    $region7: #{tpu_custom_call.1} parent=1 // pred_check_branch
      %20 = sbr.rel (0) target = $region9
    $region8: #{tpu_custom_call.1} parent=1 // pred_region
      _
    $region9: #{tpu_custom_call.1} parent=1 // pred_fallthru
      _
    // Predicated region
    $region10: #{tpu_custom_call.1} parent=1 // pred_check
      _
    $region11: #{tpu_custom_call.1} parent=1 // pred_check_branch
      %22 = sbr.rel (0) target = $region13
    $region12: #{tpu_custom_call.1} parent=1 // pred_region
      %s24 = ssub.s32 8192, 8192
      %25 = vsyncadd [#allocation3], %s24
      %s26 = sshll.u32 [#allocation2], 4
      %s27 = int_to_ptr.vmem [resolvable:$true] %s26
      %32 = dma.hbm_to_vmem [thread:$0]  %s2, 8192, %s27, [#allocation3], 256, 256, 16
    $region13: #{tpu_custom_call.1} parent=1 // pred_fallthru
      _
    // Predicated region
    $region14: #{tpu_custom_call.1} parent=1 // pred_check
      _
    $region15: #{tpu_custom_call.1} parent=1 // pred_check_branch
      %34 = sbr.rel (0) target = $region17
    $region16: #{tpu_custom_call.1} parent=1 // pred_region
      %s36 = ssub.s32 8192, 8192
      %37 = vsyncadd [#allocation6], %s36
      %s38 = sshll.u32 [#allocation5], 4
      %s39 = int_to_ptr.vmem [resolvable:$true] %s38
      %44 = dma.hbm_to_vmem [thread:$0]  %s3, 8192, %s39, [#allocation6], 128, 128, 8
    $region17: #{tpu_custom_call.1} parent=1 // pred_fallthru
      _
    // Predicated region
    $region18: #{tpu_custom_call.1} parent=1 // pred_check
      _
    $region19: #{tpu_custom_call.1} parent=1 // pred_check_branch
      %46 = sbr.rel (0) target = $region21
    $region20: #{tpu_custom_call.1} parent=1 // pred_region
      %s48 = ssub.s32 2048, 2048
      %49 = vsyncadd [#allocation6], %s48
      %s50 = sshll.u32 [#allocation7], 4
      %s51 = int_to_ptr.vmem [resolvable:$true] %s50
      %56 = dma.hbm_to_vmem [thread:$0]  %s4, 2048, %s51, [#allocation6], 64, 64, 4
    $region21: #{tpu_custom_call.1} parent=1 // pred_fallthru
      _
    // Predicated region
    $region22: #{tpu_custom_call.1} parent=1 // pred_check
      _
    $region23: #{tpu_custom_call.1} parent=1 // pred_check_branch
      %58 = sbr.rel (0) target = $region25
    $region24: #{tpu_custom_call.1} parent=1 // pred_region
      _
    $region25: #{tpu_custom_call.1} parent=1 // pred_fallthru
      _
    // Predicated region
    $region26: #{tpu_custom_call.1} parent=1 // pred_check
      _
    $region27: #{tpu_custom_call.1} parent=1 // pred_check_branch
      %60 = sbr.rel (0) target = $region29
    $region28: #{tpu_custom_call.1} parent=1 // pred_region
      %s62 = ssub.s32 512, 512
      %63 = vsyncadd [#allocation9], %s62
      %s64 = sshll.u32 [#allocation8], 4
      %s65 = int_to_ptr.vmem [resolvable:$true] %s64
      %70 = dma.hbm_to_vmem [thread:$0]  %s6, 512, %s65, [#allocation9], 64, 64, 4
    $region29: #{tpu_custom_call.1} parent=1 // pred_fallthru
      _
    // Predicated region
    $region30: #{tpu_custom_call.1} parent=1 // pred_check
      _
    $region31: #{tpu_custom_call.1} parent=1 // pred_check_branch
      %72 = sbr.rel (0) target = $region33
    $region32: #{tpu_custom_call.1} parent=1 // pred_region
      _
    $region33: #{tpu_custom_call.1} parent=1 // pred_fallthru
      _
    // Predicated region
    $region34: #{tpu_custom_call.1} parent=1 // pred_check
      _
    $region35: #{tpu_custom_call.1} parent=1 // pred_check_branch
      %74 = sbr.rel (0) target = $region37
    $region36: #{tpu_custom_call.1} parent=1 // pred_region
      %75 = dma.done [#allocation3], 8192
    $region37: #{tpu_custom_call.1} parent=1 // pred_fallthru
      _
    // Predicated region
    $region38: #{tpu_custom_call.1} parent=1 // pred_check
      _
    $region39: #{tpu_custom_call.1} parent=1 // pred_check_branch
      %77 = sbr.rel (0) target = $region41
    $region40: #{tpu_custom_call.1} parent=1 // pred_region
      %78 = dma.done [#allocation6], 8192
    $region41: #{tpu_custom_call.1} parent=1 // pred_fallthru
      _
    // Predicated region
    $region42: #{tpu_custom_call.1} parent=1 // pred_check
      _
    $region43: #{tpu_custom_call.1} parent=1 // pred_check_branch
      %80 = sbr.rel (0) target = $region45
    $region44: #{tpu_custom_call.1} parent=1 // pred_region
      %81 = dma.done [#allocation6], 2048
    $region45: #{tpu_custom_call.1} parent=1 // pred_fallthru
      _
    // Predicated region
    $region46: #{tpu_custom_call.1} parent=1 // pred_check
      _
    $region47: #{tpu_custom_call.1} parent=1 // pred_check_branch
      %83 = sbr.rel (0) target = $region49
    $region48: #{tpu_custom_call.1} parent=1 // pred_region
      %84 = dma.done [#allocation9], 512
    $region49: #{tpu_custom_call.1} parent=1 // pred_fallthru
      _
    %v86 = vld [vmem:[%s0] sm:$0xff]
    %v87 = vld [vmem:[%s7] ss:$8 sm:$0x3]
    %s88 = scalar_lea.vmem %s7, 1
    %v89 = vld [vmem:[%s88] ss:$8 sm:$0x3]
    %s90 = scalar_lea.vmem %s7, 2
    %v91 = vld [vmem:[%s90] ss:$8 sm:$0x3]
    %v92 = vpack.c.bf16 %v86, %v86
    %v93 = vld [vmem:[%s1] sm:$0xff]
    %v94 = vld [vmem:[%s1 + $0x8] sm:$0xff]
    %v95 = vld [vmem:[%s1 + $0x10] sm:$0xff]
    %v96 = vld [vmem:[%s1 + $0x18] sm:$0xff]
    %v98 = vlaneseq
    %v99 = vshrl.u32 %v98, 7
    %v100 = vsub.s32 0, %v99
    %v101 = vrot.slane %v87, %v100
    %v102 = vlaneseq
    %v103 = vshrl.u32 %v102, 7
    %v104 = vsub.s32 1, %v103
    %v105 = vrot.slane %v87, %v104
    %v112 = vunpack.c.l.b16 %v93
    %v113 = vunpack.c.h.b16 %v93
    %v114 = vunpack.c.l.b16 %v94
    %v115 = vunpack.c.h.b16 %v94
    %v116 = vunpack.c.l.b16 %v95
    %v117 = vunpack.c.h.b16 %v95
    %v118 = vunpack.c.l.b16 %v96
    %v119 = vunpack.c.h.b16 %v96
    %v120 = vpack.c.b16 %v114, %v112
    %v121 = vpack.c.b16 %v115, %v113
    %v122 = vpack.c.b16 %v118, %v116
    %v123 = vpack.c.b16 %v119, %v117
    %vm128 = vcmask 261120
    %v130 = vsel %vm128, %v92, 0
    %132 = vmatprep.subr.bf16.mxu0 %v121
    %133 = vmatpush1.bf16.msra.mxu0 %v120
    %134 = vmatprep.subr.bf16.mxu0 %v123
    %135 = vmatpush1.bf16.msra.mxu0 %v122
    %136 = vmatprep.subr.bf16.mxu0 0
    %137 = vmatpush1.bf16.msra.mxu0 0
    %138 = vmatprep.subr.bf16.mxu0 0
    %139 = vmatpush1.bf16.msra.mxu0 0
    %140 = vmatprep.subr.bf16.mxu0 0
    %141 = vmatpush1.bf16.msra.mxu0 0
    %142 = vmatprep.subr.bf16.mxu0 0
    %143 = vmatpush1.bf16.msra.mxu0 0
    %144 = vmatprep.subr.bf16.mxu0 0
    %145 = vmatpush1.bf16.msra.mxu0 0
    %146 = vmatprep.subr.bf16.mxu0 0
    %147 = vmatpush1.bf16.msra.mxu0 0
    %148 = vmatprep.subr.bf16.mxu0 0
    %149 = vmatpush1.bf16.msra.mxu0 0
    %150 = vmatprep.subr.bf16.mxu0 0
    %151 = vmatpush1.bf16.msra.mxu0 0
    %152 = vmatprep.subr.bf16.mxu0 0
    %153 = vmatpush1.bf16.msra.mxu0 0
    %154 = vmatprep.subr.bf16.mxu0 0
    %155 = vmatpush1.bf16.msra.mxu0 0
    %156 = vmatprep.subr.bf16.mxu0 0
    %157 = vmatpush1.bf16.msra.mxu0 0
    %158 = vmatprep.subr.bf16.mxu0 0
    %159 = vmatpush1.bf16.msra.mxu0 0
    %160 = vmatprep.subr.bf16.mxu0 0
    %161 = vmatpush1.bf16.msra.mxu0 0
    %162 = vmatprep.subr.bf16.mxu0 0
    %163 = vmatpush1.bf16.msra.mxu0 0
    %164 = vmatprep.mubr.bf16.mxu0 0
    %165 = vmatmul.mubr.bf16.gmra.mrb[0].mxu0 %v130
    %v166 = vpop.f32.mrb[0].mxu0
    %v167 = vadd.f32 %v101, %v166
    %v168 = vpop.f32.mrb[0].mxu0
    %v169 = vadd.f32 %v105, %v168
    %v170 = vpop.f32.mrb[0].mxu0
    %v171 = vpop.f32.mrb[0].mxu0
    %172 = vdwg.mxu0
    %v173 = vmax.f32 %v167, 0.0
    %v174 = vmax.f32 %v169, 0.0
    %v175 = vrot.slane %v173, 4
    %v176 = vadd.f32 %v173, %v175
    %v177 = vrot.slane %v176, 2
    %v178 = vadd.f32 %v176, %v177
    %v179 = vrot.slane %v178, 1
    %v180 = vadd.f32 %v178, %v179
    %v181 = vrot.slane %v174, 4
    %v182 = vadd.f32 %v174, %v181
    %v183 = vrot.slane %v182, 2
    %v184 = vadd.f32 %v182, %v183
    %v185 = vrot.slane %v184, 1
    %v186 = vadd.f32 %v184, %v185
    %v187 = vrcp.pop 8.0
    %v188 = vmul.f32 %v180, %v187
    %v189 = vmul.f32 %v186, %v187
    %v190 = vmul.f32 %v173, %v173
    %v191 = vmul.f32 %v174, %v174
    %v192 = vrot.slane %v190, 4
    %v193 = vadd.f32 %v190, %v192
    %v194 = vrot.slane %v193, 2
    %v195 = vadd.f32 %v193, %v194
    %v196 = vrot.slane %v195, 1
    %v197 = vadd.f32 %v195, %v196
    %v198 = vrot.slane %v191, 4
    %v199 = vadd.f32 %v191, %v198
    %v200 = vrot.slane %v199, 2
    %v201 = vadd.f32 %v199, %v200
    %v202 = vrot.slane %v201, 1
    %v203 = vadd.f32 %v201, %v202
    %v204 = vmul.f32 %v197, %v187
    %v205 = vmul.f32 %v203, %v187
    %v206 = vmul.f32 %v188, %v188
    %v207 = vmul.f32 %v189, %v189
    %v208 = vsub.f32 %v204, %v206
    %v209 = vsub.f32 %v205, %v207
    %v210 = vadd.f32 %v208, 1e-05
    %v211 = vadd.f32 %v209, 1e-05
    %v212 = vrsqrt.pop %v210
    %v213 = vrsqrt.pop %v211
    %v216 = vcombine.low %v212, %v213
    %v218 = vunpack.c.l.s4 1966171168
    %v219 = vunpack.c.0.s8 %v218
    %v220 = vlaneseq
    %v221 = vshrl.u32 %v220, 7
    %v222 = vsub.s32 %v219, %v221
    %v223 = vrot.slane %v216, %v222
    %v225 = vunpack.c.l.s4 1966171168
    %v226 = vunpack.c.0.s8 %v225
    %v227 = vlaneseq
    %v228 = vshrl.u32 %v227, 7
    %v229 = vsub.s32 %v226, %v228
    %v230 = vrot.slane %v223, %v229
    %v232 = vmul.f32 %v89, %v230
    %v234 = vlaneseq
    %v235 = vshrl.u32 %v234, 7
    %v236 = vsub.s32 0, %v235
    %v237 = vrot.slane %v232, %v236
    %v238 = vlaneseq
    %v239 = vshrl.u32 %v238, 7
    %v240 = vsub.s32 1, %v239
    %v241 = vrot.slane %v232, %v240
    %v244 = vmul.f32 %v188, %v237
    %v245 = vmul.f32 %v189, %v241
    %v248 = vcombine.low %v244, %v245
    %v250 = vunpack.c.l.s4 1966171168
    %v251 = vunpack.c.0.s8 %v250
    %v252 = vlaneseq
    %v253 = vshrl.u32 %v252, 7
    %v254 = vsub.s32 %v251, %v253
    %v255 = vrot.slane %v248, %v254
    %v257 = vunpack.c.l.s4 1966171168
    %v258 = vunpack.c.0.s8 %v257
    %v259 = vlaneseq
    %v260 = vshrl.u32 %v259, 7
    %v261 = vsub.s32 %v258, %v260
    %v262 = vrot.slane %v255, %v261
    %v264 = vsub.f32 %v91, %v262
    %v265 = vmul.f32 %v173, %v237
    %v266 = vmul.f32 %v174, %v241
    %v268 = vlaneseq
    %v269 = vshrl.u32 %v268, 7
    %v270 = vsub.s32 0, %v269
    %v271 = vrot.slane %v264, %v270
    %v272 = vlaneseq
    %v273 = vshrl.u32 %v272, 7
    %v274 = vsub.s32 1, %v273
    %v275 = vrot.slane %v264, %v274
    %v278 = vadd.f32 %v265, %v271
    %v279 = vadd.f32 %v266, %v275
    %s280 = scalar_lea.vmem %s7, 3
    %v281 = vld [vmem:[%s280] ss:$8 sm:$0xf]
    %s282 = scalar_lea.vmem %s7, 4
    %v283 = vld [vmem:[%s282] ss:$8 sm:$0xf]
    %s284 = scalar_lea.vmem %s7, 5
    %v285 = vld [vmem:[%s284] ss:$8 sm:$0xf]
    %v286 = vpack.c.bf16 %v278, %v278
    %v287 = vpack.c.bf16 %v279, %v279
    %v288 = vld [vmem:[#allocation2] sm:$0xff]
    %v289 = vld [vmem:[#allocation2 + $0x8] sm:$0xff]
    %v290 = vld [vmem:[#allocation2 + $0x10] sm:$0xff]
    %v291 = vld [vmem:[#allocation2 + $0x18] sm:$0xff]
    %v292 = vld [vmem:[#allocation2 + $0x20] sm:$0xff]
    %v293 = vld [vmem:[#allocation2 + $0x28] sm:$0xff]
    %v294 = vld [vmem:[#allocation2 + $0x30] sm:$0xff]
    %v295 = vld [vmem:[#allocation2 + $0x38] sm:$0xff]
    %v296 = vld [vmem:[#allocation2 + $0x40] sm:$0xff]
    %v297 = vld [vmem:[#allocation2 + $0x48] sm:$0xff]
    %v298 = vld [vmem:[#allocation2 + $0x50] sm:$0xff]
    %v299 = vld [vmem:[#allocation2 + $0x58] sm:$0xff]
    %v300 = vld [vmem:[#allocation2 + $0x60] sm:$0xff]
    %v301 = vld [vmem:[#allocation2 + $0x68] sm:$0xff]
    %v302 = vld [vmem:[#allocation2 + $0x70] sm:$0xff]
    %v303 = vld [vmem:[#allocation2 + $0x78] sm:$0xff]
    %v304 = vld [vmem:[#allocation2 + $0x80] sm:$0xff]
    %v305 = vld [vmem:[#allocation2 + $0x88] sm:$0xff]
    %v306 = vld [vmem:[#allocation2 + $0x90] sm:$0xff]
    %v307 = vld [vmem:[#allocation2 + $0x98] sm:$0xff]
    %v308 = vld [vmem:[#allocation2 + $0xa0] sm:$0xff]
    %v309 = vld [vmem:[#allocation2 + $0xa8] sm:$0xff]
    %v310 = vld [vmem:[#allocation2 + $0xb0] sm:$0xff]
    %v311 = vld [vmem:[#allocation2 + $0xb8] sm:$0xff]
    %v312 = vld [vmem:[#allocation2 + $0xc0] sm:$0xff]
    %v313 = vld [vmem:[#allocation2 + $0xc8] sm:$0xff]
    %v314 = vld [vmem:[#allocation2 + $0xd0] sm:$0xff]
    %v315 = vld [vmem:[#allocation2 + $0xd8] sm:$0xff]
    %v316 = vld [vmem:[#allocation2 + $0xe0] sm:$0xff]
    %v317 = vld [vmem:[#allocation2 + $0xe8] sm:$0xff]
    %v318 = vld [vmem:[#allocation2 + $0xf0] sm:$0xff]
    %v319 = vld [vmem:[#allocation2 + $0xf8] sm:$0xff]
    %v320 = vld [vmem:[#allocation2 + $0x100] sm:$0xff]
    %v321 = vld [vmem:[#allocation2 + $0x108] sm:$0xff]
    %v322 = vld [vmem:[#allocation2 + $0x110] sm:$0xff]
    %v323 = vld [vmem:[#allocation2 + $0x118] sm:$0xff]
    %v324 = vld [vmem:[#allocation2 + $0x120] sm:$0xff]
    %v325 = vld [vmem:[#allocation2 + $0x128] sm:$0xff]
    %v326 = vld [vmem:[#allocation2 + $0x130] sm:$0xff]
    %v327 = vld [vmem:[#allocation2 + $0x138] sm:$0xff]
    %v328 = vld [vmem:[#allocation2 + $0x140] sm:$0xff]
    %v329 = vld [vmem:[#allocation2 + $0x148] sm:$0xff]
    %v330 = vld [vmem:[#allocation2 + $0x150] sm:$0xff]
    %v331 = vld [vmem:[#allocation2 + $0x158] sm:$0xff]
    %v332 = vld [vmem:[#allocation2 + $0x160] sm:$0xff]
    %v333 = vld [vmem:[#allocation2 + $0x168] sm:$0xff]
    %v334 = vld [vmem:[#allocation2 + $0x170] sm:$0xff]
    %v335 = vld [vmem:[#allocation2 + $0x178] sm:$0xff]
    %v336 = vld [vmem:[#allocation2 + $0x180] sm:$0xff]
    %v337 = vld [vmem:[#allocation2 + $0x188] sm:$0xff]
    %v338 = vld [vmem:[#allocation2 + $0x190] sm:$0xff]
    %v339 = vld [vmem:[#allocation2 + $0x198] sm:$0xff]
    %v340 = vld [vmem:[#allocation2 + $0x1a0] sm:$0xff]
    %v341 = vld [vmem:[#allocation2 + $0x1a8] sm:$0xff]
    %v342 = vld [vmem:[#allocation2 + $0x1b0] sm:$0xff]
    %v343 = vld [vmem:[#allocation2 + $0x1b8] sm:$0xff]
    %v344 = vld [vmem:[#allocation2 + $0x1c0] sm:$0xff]
    %v345 = vld [vmem:[#allocation2 + $0x1c8] sm:$0xff]
    %v346 = vld [vmem:[#allocation2 + $0x1d0] sm:$0xff]
    %v347 = vld [vmem:[#allocation2 + $0x1d8] sm:$0xff]
    %v348 = vld [vmem:[#allocation2 + $0x1e0] sm:$0xff]
    %v349 = vld [vmem:[#allocation2 + $0x1e8] sm:$0xff]
    %v350 = vld [vmem:[#allocation2 + $0x1f0] sm:$0xff]
    %v351 = vld [vmem:[#allocation2 + $0x1f8] sm:$0xff]
    %v353 = vlaneseq
    %v354 = vshrl.u32 %v353, 7
    %v355 = vsub.s32 0, %v354
    %v356 = vrot.slane %v281, %v355
    %v357 = vlaneseq
    %v358 = vshrl.u32 %v357, 7
    %v359 = vsub.s32 1, %v358
    %v360 = vrot.slane %v281, %v359
    %v361 = vlaneseq
    %v362 = vshrl.u32 %v361, 7
    %v363 = vsub.s32 2, %v362
    %v364 = vrot.slane %v281, %v363
    %v365 = vlaneseq
    %v366 = vshrl.u32 %v365, 7
    %v367 = vsub.s32 3, %v366
    %v368 = vrot.slane %v281, %v367
    %v437 = vunpack.c.l.b16 %v288
    %v438 = vunpack.c.h.b16 %v288
    %v439 = vunpack.c.l.b16 %v289
    %v440 = vunpack.c.h.b16 %v289
    %v441 = vunpack.c.l.b16 %v290
    %v442 = vunpack.c.h.b16 %v290
    %v443 = vunpack.c.l.b16 %v291
    %v444 = vunpack.c.h.b16 %v291
    %v445 = vunpack.c.l.b16 %v292
    %v446 = vunpack.c.h.b16 %v292
    %v447 = vunpack.c.l.b16 %v293
    %v448 = vunpack.c.h.b16 %v293
    %v449 = vunpack.c.l.b16 %v294
    %v450 = vunpack.c.h.b16 %v294
    %v451 = vunpack.c.l.b16 %v295
    %v452 = vunpack.c.h.b16 %v295
    %v453 = vunpack.c.l.b16 %v296
    %v454 = vunpack.c.h.b16 %v296
    %v455 = vunpack.c.l.b16 %v297
    %v456 = vunpack.c.h.b16 %v297
    %v457 = vunpack.c.l.b16 %v298
    %v458 = vunpack.c.h.b16 %v298
    %v459 = vunpack.c.l.b16 %v299
    %v460 = vunpack.c.h.b16 %v299
    %v461 = vunpack.c.l.b16 %v300
    %v462 = vunpack.c.h.b16 %v300
    %v463 = vunpack.c.l.b16 %v301
    %v464 = vunpack.c.h.b16 %v301
    %v465 = vunpack.c.l.b16 %v302
    %v466 = vunpack.c.h.b16 %v302
    %v467 = vunpack.c.l.b16 %v303
    %v468 = vunpack.c.h.b16 %v303
    %v469 = vunpack.c.l.b16 %v304
    %v470 = vunpack.c.h.b16 %v304
    %v471 = vunpack.c.l.b16 %v305
    %v472 = vunpack.c.h.b16 %v305
    %v473 = vunpack.c.l.b16 %v306
    %v474 = vunpack.c.h.b16 %v306
    %v475 = vunpack.c.l.b16 %v307
    %v476 = vunpack.c.h.b16 %v307
    %v477 = vunpack.c.l.b16 %v308
    %v478 = vunpack.c.h.b16 %v308
    %v479 = vunpack.c.l.b16 %v309
    %v480 = vunpack.c.h.b16 %v309
    %v481 = vunpack.c.l.b16 %v310
    %v482 = vunpack.c.h.b16 %v310
    %v483 = vunpack.c.l.b16 %v311
    %v484 = vunpack.c.h.b16 %v311
    %v485 = vunpack.c.l.b16 %v312
    %v486 = vunpack.c.h.b16 %v312
    %v487 = vunpack.c.l.b16 %v313
    %v488 = vunpack.c.h.b16 %v313
    %v489 = vunpack.c.l.b16 %v314
    %v490 = vunpack.c.h.b16 %v314
    %v491 = vunpack.c.l.b16 %v315
    %v492 = vunpack.c.h.b16 %v315
    %v493 = vunpack.c.l.b16 %v316
    %v494 = vunpack.c.h.b16 %v316
    %v495 = vunpack.c.l.b16 %v317
    %v496 = vunpack.c.h.b16 %v317
    %v497 = vunpack.c.l.b16 %v318
    %v498 = vunpack.c.h.b16 %v318
    %v499 = vunpack.c.l.b16 %v319
    %v500 = vunpack.c.h.b16 %v319
    %v501 = vunpack.c.l.b16 %v320
    %v502 = vunpack.c.h.b16 %v320
    %v503 = vunpack.c.l.b16 %v321
    %v504 = vunpack.c.h.b16 %v321
    %v505 = vunpack.c.l.b16 %v322
    %v506 = vunpack.c.h.b16 %v322
    %v507 = vunpack.c.l.b16 %v323
    %v508 = vunpack.c.h.b16 %v323
    %v509 = vunpack.c.l.b16 %v324
    %v510 = vunpack.c.h.b16 %v324
    %v511 = vunpack.c.l.b16 %v325
    %v512 = vunpack.c.h.b16 %v325
    %v513 = vunpack.c.l.b16 %v326
    %v514 = vunpack.c.h.b16 %v326
    %v515 = vunpack.c.l.b16 %v327
    %v516 = vunpack.c.h.b16 %v327
    %v517 = vunpack.c.l.b16 %v328
    %v518 = vunpack.c.h.b16 %v328
    %v519 = vunpack.c.l.b16 %v329
    %v520 = vunpack.c.h.b16 %v329
    %v521 = vunpack.c.l.b16 %v330
    %v522 = vunpack.c.h.b16 %v330
    %v523 = vunpack.c.l.b16 %v331
    %v524 = vunpack.c.h.b16 %v331
    %v525 = vunpack.c.l.b16 %v332
    %v526 = vunpack.c.h.b16 %v332
    %v527 = vunpack.c.l.b16 %v333
    %v528 = vunpack.c.h.b16 %v333
    %v529 = vunpack.c.l.b16 %v334
    %v530 = vunpack.c.h.b16 %v334
    %v531 = vunpack.c.l.b16 %v335
    %v532 = vunpack.c.h.b16 %v335
    %v533 = vunpack.c.l.b16 %v336
    %v534 = vunpack.c.h.b16 %v336
    %v535 = vunpack.c.l.b16 %v337
    %v536 = vunpack.c.h.b16 %v337
    %v537 = vunpack.c.l.b16 %v338
    %v538 = vunpack.c.h.b16 %v338
    %v539 = vunpack.c.l.b16 %v339
    %v540 = vunpack.c.h.b16 %v339
    %v541 = vunpack.c.l.b16 %v340
    %v542 = vunpack.c.h.b16 %v340
    %v543 = vunpack.c.l.b16 %v341
    %v544 = vunpack.c.h.b16 %v341
    %v545 = vunpack.c.l.b16 %v342
    %v546 = vunpack.c.h.b16 %v342
    %v547 = vunpack.c.l.b16 %v343
    %v548 = vunpack.c.h.b16 %v343
    %v549 = vunpack.c.l.b16 %v344
    %v550 = vunpack.c.h.b16 %v344
    %v551 = vunpack.c.l.b16 %v345
    %v552 = vunpack.c.h.b16 %v345
    %v553 = vunpack.c.l.b16 %v346
    %v554 = vunpack.c.h.b16 %v346
    %v555 = vunpack.c.l.b16 %v347
    %v556 = vunpack.c.h.b16 %v347
    %v557 = vunpack.c.l.b16 %v348
    %v558 = vunpack.c.h.b16 %v348
    %v559 = vunpack.c.l.b16 %v349
    %v560 = vunpack.c.h.b16 %v349
    %v561 = vunpack.c.l.b16 %v350
    %v562 = vunpack.c.h.b16 %v350
    %v563 = vunpack.c.l.b16 %v351
    %v564 = vunpack.c.h.b16 %v351
    %v565 = vpack.c.b16 %v441, %v437
    %v566 = vpack.c.b16 %v442, %v438
    %v567 = vpack.c.b16 %v443, %v439
    %v568 = vpack.c.b16 %v444, %v440
    %v569 = vpack.c.b16 %v449, %v445
    %v570 = vpack.c.b16 %v450, %v446
    %v571 = vpack.c.b16 %v451, %v447
    %v572 = vpack.c.b16 %v452, %v448
    %v573 = vpack.c.b16 %v457, %v453
    %v574 = vpack.c.b16 %v458, %v454
    %v575 = vpack.c.b16 %v459, %v455
    %v576 = vpack.c.b16 %v460, %v456
    %v577 = vpack.c.b16 %v465, %v461
    %v578 = vpack.c.b16 %v466, %v462
    %v579 = vpack.c.b16 %v467, %v463
    %v580 = vpack.c.b16 %v468, %v464
    %v581 = vpack.c.b16 %v473, %v469
    %v582 = vpack.c.b16 %v474, %v470
    %v583 = vpack.c.b16 %v475, %v471
    %v584 = vpack.c.b16 %v476, %v472
    %v585 = vpack.c.b16 %v481, %v477
    %v586 = vpack.c.b16 %v482, %v478
    %v587 = vpack.c.b16 %v483, %v479
    %v588 = vpack.c.b16 %v484, %v480
    %v589 = vpack.c.b16 %v489, %v485
    %v590 = vpack.c.b16 %v490, %v486
    %v591 = vpack.c.b16 %v491, %v487
    %v592 = vpack.c.b16 %v492, %v488
    %v593 = vpack.c.b16 %v497, %v493
    %v594 = vpack.c.b16 %v498, %v494
    %v595 = vpack.c.b16 %v499, %v495
    %v596 = vpack.c.b16 %v500, %v496
    %v597 = vpack.c.b16 %v505, %v501
    %v598 = vpack.c.b16 %v506, %v502
    %v599 = vpack.c.b16 %v507, %v503
    %v600 = vpack.c.b16 %v508, %v504
    %v601 = vpack.c.b16 %v513, %v509
    %v602 = vpack.c.b16 %v514, %v510
    %v603 = vpack.c.b16 %v515, %v511
    %v604 = vpack.c.b16 %v516, %v512
    %v605 = vpack.c.b16 %v521, %v517
    %v606 = vpack.c.b16 %v522, %v518
    %v607 = vpack.c.b16 %v523, %v519
    %v608 = vpack.c.b16 %v524, %v520
    %v609 = vpack.c.b16 %v529, %v525
    %v610 = vpack.c.b16 %v530, %v526
    %v611 = vpack.c.b16 %v531, %v527
    %v612 = vpack.c.b16 %v532, %v528
    %v613 = vpack.c.b16 %v537, %v533
    %v614 = vpack.c.b16 %v538, %v534
    %v615 = vpack.c.b16 %v539, %v535
    %v616 = vpack.c.b16 %v540, %v536
    %v617 = vpack.c.b16 %v545, %v541
    %v618 = vpack.c.b16 %v546, %v542
    %v619 = vpack.c.b16 %v547, %v543
    %v620 = vpack.c.b16 %v548, %v544
    %v621 = vpack.c.b16 %v553, %v549
    %v622 = vpack.c.b16 %v554, %v550
    %v623 = vpack.c.b16 %v555, %v551
    %v624 = vpack.c.b16 %v556, %v552
    %v625 = vpack.c.b16 %v561, %v557
    %v626 = vpack.c.b16 %v562, %v558
    %v627 = vpack.c.b16 %v563, %v559
    %v628 = vpack.c.b16 %v564, %v560
    %693 = vmatprep.subr.bf16.mxu0 %v566
    %694 = vmatpush1.bf16.msra.mxu0 %v565
    %695 = vmatprep.subr.bf16.mxu0 %v570
    %696 = vmatpush1.bf16.msra.mxu0 %v569
    %697 = vmatprep.subr.bf16.mxu0 %v574
    %698 = vmatpush1.bf16.msra.mxu0 %v573
    %699 = vmatprep.subr.bf16.mxu0 %v578
    %700 = vmatpush1.bf16.msra.mxu0 %v577
    %701 = vmatprep.subr.bf16.mxu0 %v582
    %702 = vmatpush1.bf16.msra.mxu0 %v581
    %703 = vmatprep.subr.bf16.mxu0 %v586
    %704 = vmatpush1.bf16.msra.mxu0 %v585
    %705 = vmatprep.subr.bf16.mxu0 %v590
    %706 = vmatpush1.bf16.msra.mxu0 %v589
    %707 = vmatprep.subr.bf16.mxu0 %v594
    %708 = vmatpush1.bf16.msra.mxu0 %v593
    %709 = vmatprep.subr.bf16.mxu0 %v598
    %710 = vmatpush1.bf16.msra.mxu0 %v597
    %711 = vmatprep.subr.bf16.mxu0 %v602
    %712 = vmatpush1.bf16.msra.mxu0 %v601
    %713 = vmatprep.subr.bf16.mxu0 %v606
    %714 = vmatpush1.bf16.msra.mxu0 %v605
    %715 = vmatprep.subr.bf16.mxu0 %v610
    %716 = vmatpush1.bf16.msra.mxu0 %v609
    %717 = vmatprep.subr.bf16.mxu0 %v614
    %718 = vmatpush1.bf16.msra.mxu0 %v613
    %719 = vmatprep.subr.bf16.mxu0 %v618
    %720 = vmatpush1.bf16.msra.mxu0 %v617
    %721 = vmatprep.subr.bf16.mxu0 %v622
    %722 = vmatpush1.bf16.msra.mxu0 %v621
    %723 = vmatprep.subr.bf16.mxu0 %v626
    %724 = vmatpush1.bf16.msra.mxu0 %v625
    %725 = vmatprep.mubr.bf16.mxu0 %v287
    %726 = vmatmul.mubr.bf16.gmra.mrb[0].mxu0 %v286
    %v727 = vpop.f32.mrb[0].mxu0
    %v728 = vadd.f32 %v356, %v727
    %v729 = vpop.f32.mrb[0].mxu0
    %v730 = vadd.f32 %v360, %v729
    %v731 = vpop.f32.mrb[0].mxu0
    %v732 = vpop.f32.mrb[0].mxu0
    %733 = vdwg.mxu0
    %734 = vmatprep.subr.bf16.mxu0 %v568
    %735 = vmatpush1.bf16.msra.mxu0 %v567
    %736 = vmatprep.subr.bf16.mxu0 %v572
    %737 = vmatpush1.bf16.msra.mxu0 %v571
    %738 = vmatprep.subr.bf16.mxu0 %v576
    %739 = vmatpush1.bf16.msra.mxu0 %v575
    %740 = vmatprep.subr.bf16.mxu0 %v580
    %741 = vmatpush1.bf16.msra.mxu0 %v579
    %742 = vmatprep.subr.bf16.mxu0 %v584
    %743 = vmatpush1.bf16.msra.mxu0 %v583
    %744 = vmatprep.subr.bf16.mxu0 %v588
    %745 = vmatpush1.bf16.msra.mxu0 %v587
    %746 = vmatprep.subr.bf16.mxu0 %v592
    %747 = vmatpush1.bf16.msra.mxu0 %v591
    %748 = vmatprep.subr.bf16.mxu0 %v596
    %749 = vmatpush1.bf16.msra.mxu0 %v595
    %750 = vmatprep.subr.bf16.mxu0 %v600
    %751 = vmatpush1.bf16.msra.mxu0 %v599
    %752 = vmatprep.subr.bf16.mxu0 %v604
    %753 = vmatpush1.bf16.msra.mxu0 %v603
    %754 = vmatprep.subr.bf16.mxu0 %v608
    %755 = vmatpush1.bf16.msra.mxu0 %v607
    %756 = vmatprep.subr.bf16.mxu0 %v612
    %757 = vmatpush1.bf16.msra.mxu0 %v611
    %758 = vmatprep.subr.bf16.mxu0 %v616
    %759 = vmatpush1.bf16.msra.mxu0 %v615
    %760 = vmatprep.subr.bf16.mxu0 %v620
    %761 = vmatpush1.bf16.msra.mxu0 %v619
    %762 = vmatprep.subr.bf16.mxu0 %v624
    %763 = vmatpush1.bf16.msra.mxu0 %v623
    %764 = vmatprep.subr.bf16.mxu0 %v628
    %765 = vmatpush1.bf16.msra.mxu0 %v627
    %766 = vmatprep.mubr.bf16.mxu0 %v287
    %767 = vmatmul.mubr.bf16.gmra.mrb[0].mxu0 %v286
    %v768 = vpop.f32.mrb[0].mxu0
    %v769 = vadd.f32 %v364, %v768
    %v770 = vpop.f32.mrb[0].mxu0
    %v771 = vadd.f32 %v368, %v770
    %v772 = vpop.f32.mrb[0].mxu0
    %v773 = vpop.f32.mrb[0].mxu0
    %774 = vdwg.mxu0
    %v775 = vmax.f32 %v728, 0.0
    %v776 = vmax.f32 %v730, 0.0
    %v777 = vmax.f32 %v769, 0.0
    %v778 = vmax.f32 %v771, 0.0
    %v779 = vrot.slane %v775, 4
    %v780 = vadd.f32 %v775, %v779
    %v781 = vrot.slane %v780, 2
    %v782 = vadd.f32 %v780, %v781
    %v783 = vrot.slane %v782, 1
    %v784 = vadd.f32 %v782, %v783
    %v785 = vrot.slane %v776, 4
    %v786 = vadd.f32 %v776, %v785
    %v787 = vrot.slane %v786, 2
    %v788 = vadd.f32 %v786, %v787
    %v789 = vrot.slane %v788, 1
    %v790 = vadd.f32 %v788, %v789
    %v791 = vrot.slane %v777, 4
    %v792 = vadd.f32 %v777, %v791
    %v793 = vrot.slane %v792, 2
    %v794 = vadd.f32 %v792, %v793
    %v795 = vrot.slane %v794, 1
    %v796 = vadd.f32 %v794, %v795
    %v797 = vrot.slane %v778, 4
    %v798 = vadd.f32 %v778, %v797
    %v799 = vrot.slane %v798, 2
    %v800 = vadd.f32 %v798, %v799
    %v801 = vrot.slane %v800, 1
    %v802 = vadd.f32 %v800, %v801
    %v803 = vmul.f32 %v784, %v187
    %v804 = vmul.f32 %v790, %v187
    %v805 = vmul.f32 %v796, %v187
    %v806 = vmul.f32 %v802, %v187
    %v807 = vmul.f32 %v775, %v775
    %v808 = vmul.f32 %v776, %v776
    %v809 = vmul.f32 %v777, %v777
    %v810 = vmul.f32 %v778, %v778
    %v811 = vrot.slane %v807, 4
    %v812 = vadd.f32 %v807, %v811
    %v813 = vrot.slane %v812, 2
    %v814 = vadd.f32 %v812, %v813
    %v815 = vrot.slane %v814, 1
    %v816 = vadd.f32 %v814, %v815
    %v817 = vrot.slane %v808, 4
    %v818 = vadd.f32 %v808, %v817
    %v819 = vrot.slane %v818, 2
    %v820 = vadd.f32 %v818, %v819
    %v821 = vrot.slane %v820, 1
    %v822 = vadd.f32 %v820, %v821
    %v823 = vrot.slane %v809, 4
    %v824 = vadd.f32 %v809, %v823
    %v825 = vrot.slane %v824, 2
    %v826 = vadd.f32 %v824, %v825
    %v827 = vrot.slane %v826, 1
    %v828 = vadd.f32 %v826, %v827
    %v829 = vrot.slane %v810, 4
    %v830 = vadd.f32 %v810, %v829
    %v831 = vrot.slane %v830, 2
    %v832 = vadd.f32 %v830, %v831
    %v833 = vrot.slane %v832, 1
    %v834 = vadd.f32 %v832, %v833
    %v835 = vmul.f32 %v816, %v187
    %v836 = vmul.f32 %v822, %v187
    %v837 = vmul.f32 %v828, %v187
    %v838 = vmul.f32 %v834, %v187
    %v839 = vmul.f32 %v803, %v803
    %v840 = vmul.f32 %v804, %v804
    %v841 = vmul.f32 %v805, %v805
    %v842 = vmul.f32 %v806, %v806
    %v843 = vsub.f32 %v835, %v839
    %v844 = vsub.f32 %v836, %v840
    %v845 = vsub.f32 %v837, %v841
    %v846 = vsub.f32 %v838, %v842
    %v847 = vadd.f32 %v843, 1e-05
    %v848 = vadd.f32 %v844, 1e-05
    %v849 = vadd.f32 %v845, 1e-05
    %v850 = vadd.f32 %v846, 1e-05
    %v851 = vrsqrt.pop %v847
    %v852 = vrsqrt.pop %v848
    %v853 = vrsqrt.pop %v849
    %v854 = vrsqrt.pop %v850
    %v859 = vcombine.low %v851, %v852
    %v860 = vcombine.low %v853, %v854
    %v862 = vunpack.c.l.s4 1966171168
    %v863 = vunpack.c.0.s8 %v862
    %v864 = vlaneseq
    %v865 = vshrl.u32 %v864, 7
    %v866 = vsub.s32 %v863, %v865
    %v867 = vrot.slane %v859, %v866
    %v869 = vunpack.c.l.s4 1966171168
    %v870 = vunpack.c.0.s8 %v869
    %v871 = vlaneseq
    %v872 = vshrl.u32 %v871, 7
    %v873 = vsub.s32 %v870, %v872
    %v874 = vrot.slane %v860, %v873
    %v875 = vcombine.low %v867, %v874
    %v877 = vunpack.c.l.s4 1966171168
    %v878 = vunpack.c.0.s8 %v877
    %v879 = vlaneseq
    %v880 = vshrl.u32 %v879, 7
    %v881 = vsub.s32 %v878, %v880
    %v882 = vrot.slane %v875, %v881
    %v884 = vmul.f32 %v283, %v882
    %v886 = vlaneseq
    %v887 = vshrl.u32 %v886, 7
    %v888 = vsub.s32 0, %v887
    %v889 = vrot.slane %v884, %v888
    %v890 = vlaneseq
    %v891 = vshrl.u32 %v890, 7
    %v892 = vsub.s32 1, %v891
    %v893 = vrot.slane %v884, %v892
    %v894 = vlaneseq
    %v895 = vshrl.u32 %v894, 7
    %v896 = vsub.s32 2, %v895
    %v897 = vrot.slane %v884, %v896
    %v898 = vlaneseq
    %v899 = vshrl.u32 %v898, 7
    %v900 = vsub.s32 3, %v899
    %v901 = vrot.slane %v884, %v900
    %v906 = vmul.f32 %v803, %v889
    %v907 = vmul.f32 %v804, %v893
    %v908 = vmul.f32 %v805, %v897
    %v909 = vmul.f32 %v806, %v901
    %v914 = vcombine.low %v906, %v907
    %v915 = vcombine.low %v908, %v909
    %v917 = vunpack.c.l.s4 1966171168
    %v918 = vunpack.c.0.s8 %v917
    %v919 = vlaneseq
    %v920 = vshrl.u32 %v919, 7
    %v921 = vsub.s32 %v918, %v920
    %v922 = vrot.slane %v914, %v921
    %v924 = vunpack.c.l.s4 1966171168
    %v925 = vunpack.c.0.s8 %v924
    %v926 = vlaneseq
    %v927 = vshrl.u32 %v926, 7
    %v928 = vsub.s32 %v925, %v927
    %v929 = vrot.slane %v915, %v928
    %v930 = vcombine.low %v922, %v929
    %v932 = vunpack.c.l.s4 1966171168
    %v933 = vunpack.c.0.s8 %v932
    %v934 = vlaneseq
    %v935 = vshrl.u32 %v934, 7
    %v936 = vsub.s32 %v933, %v935
    %v937 = vrot.slane %v930, %v936
    %v939 = vsub.f32 %v285, %v937
    %v940 = vmul.f32 %v775, %v889
    %v941 = vmul.f32 %v776, %v893
    %v942 = vmul.f32 %v777, %v897
    %v943 = vmul.f32 %v778, %v901
    %v945 = vlaneseq
    %v946 = vshrl.u32 %v945, 7
    %v947 = vsub.s32 0, %v946
    %v948 = vrot.slane %v939, %v947
    %v949 = vlaneseq
    %v950 = vshrl.u32 %v949, 7
    %v951 = vsub.s32 1, %v950
    %v952 = vrot.slane %v939, %v951
    %v953 = vlaneseq
    %v954 = vshrl.u32 %v953, 7
    %v955 = vsub.s32 2, %v954
    %v956 = vrot.slane %v939, %v955
    %v957 = vlaneseq
    %v958 = vshrl.u32 %v957, 7
    %v959 = vsub.s32 3, %v958
    %v960 = vrot.slane %v939, %v959
    %v965 = vadd.f32 %v940, %v948
    %v966 = vadd.f32 %v941, %v952
    %v967 = vadd.f32 %v942, %v956
    %v968 = vadd.f32 %v943, %v960
    %s969 = scalar_lea.vmem %s7, 6
    %v970 = vld [vmem:[%s969] ss:$8 sm:$0x3]
    %s971 = scalar_lea.vmem %s7, 7
    %v972 = vld [vmem:[%s971] ss:$8 sm:$0x3]
    %s973 = scalar_lea.vmem %s7, 32
    %v974 = vld [vmem:[%s973] ss:$8 sm:$0x3]
    %v975 = vpack.c.bf16 %v965, %v965
    %v976 = vpack.c.bf16 %v966, %v966
    %v977 = vpack.c.bf16 %v967, %v967
    %v978 = vpack.c.bf16 %v968, %v968
    %v979 = vld [vmem:[#allocation5] sm:$0xff]
    %v980 = vld [vmem:[#allocation5 + $0x8] sm:$0xff]
    %v981 = vld [vmem:[#allocation5 + $0x10] sm:$0xff]
    %v982 = vld [vmem:[#allocation5 + $0x18] sm:$0xff]
    %v983 = vld [vmem:[#allocation5 + $0x20] sm:$0xff]
    %v984 = vld [vmem:[#allocation5 + $0x28] sm:$0xff]
    %v985 = vld [vmem:[#allocation5 + $0x30] sm:$0xff]
    %v986 = vld [vmem:[#allocation5 + $0x38] sm:$0xff]
    %v987 = vld [vmem:[#allocation5 + $0x40] sm:$0xff]
    %v988 = vld [vmem:[#allocation5 + $0x48] sm:$0xff]
    %v989 = vld [vmem:[#allocation5 + $0x50] sm:$0xff]
    %v990 = vld [vmem:[#allocation5 + $0x58] sm:$0xff]
    %v991 = vld [vmem:[#allocation5 + $0x60] sm:$0xff]
    %v992 = vld [vmem:[#allocation5 + $0x68] sm:$0xff]
    %v993 = vld [vmem:[#allocation5 + $0x70] sm:$0xff]
    %v994 = vld [vmem:[#allocation5 + $0x78] sm:$0xff]
    %v995 = vld [vmem:[#allocation5 + $0x80] sm:$0xff]
    %v996 = vld [vmem:[#allocation5 + $0x88] sm:$0xff]
    %v997 = vld [vmem:[#allocation5 + $0x90] sm:$0xff]
    %v998 = vld [vmem:[#allocation5 + $0x98] sm:$0xff]
    %v999 = vld [vmem:[#allocation5 + $0xa0] sm:$0xff]
    %v1000 = vld [vmem:[#allocation5 + $0xa8] sm:$0xff]
    %v1001 = vld [vmem:[#allocation5 + $0xb0] sm:$0xff]
    %v1002 = vld [vmem:[#allocation5 + $0xb8] sm:$0xff]
    %v1003 = vld [vmem:[#allocation5 + $0xc0] sm:$0xff]
    %v1004 = vld [vmem:[#allocation5 + $0xc8] sm:$0xff]
    %v1005 = vld [vmem:[#allocation5 + $0xd0] sm:$0xff]
    %v1006 = vld [vmem:[#allocation5 + $0xd8] sm:$0xff]
    %v1007 = vld [vmem:[#allocation5 + $0xe0] sm:$0xff]
    %v1008 = vld [vmem:[#allocation5 + $0xe8] sm:$0xff]
    %v1009 = vld [vmem:[#allocation5 + $0xf0] sm:$0xff]
    %v1010 = vld [vmem:[#allocation5 + $0xf8] sm:$0xff]
    %v1011 = vld [vmem:[#allocation5 + $0x100] sm:$0xff]
    %v1012 = vld [vmem:[#allocation5 + $0x108] sm:$0xff]
    %v1013 = vld [vmem:[#allocation5 + $0x110] sm:$0xff]
    %v1014 = vld [vmem:[#allocation5 + $0x118] sm:$0xff]
    %v1015 = vld [vmem:[#allocation5 + $0x120] sm:$0xff]
    %v1016 = vld [vmem:[#allocation5 + $0x128] sm:$0xff]
    %v1017 = vld [vmem:[#allocation5 + $0x130] sm:$0xff]
    %v1018 = vld [vmem:[#allocation5 + $0x138] sm:$0xff]
    %v1019 = vld [vmem:[#allocation5 + $0x140] sm:$0xff]
    %v1020 = vld [vmem:[#allocation5 + $0x148] sm:$0xff]
    %v1021 = vld [vmem:[#allocation5 + $0x150] sm:$0xff]
    %v1022 = vld [vmem:[#allocation5 + $0x158] sm:$0xff]
    %v1023 = vld [vmem:[#allocation5 + $0x160] sm:$0xff]
    %v1024 = vld [vmem:[#allocation5 + $0x168] sm:$0xff]
    %v1025 = vld [vmem:[#allocation5 + $0x170] sm:$0xff]
    %v1026 = vld [vmem:[#allocation5 + $0x178] sm:$0xff]
    %v1027 = vld [vmem:[#allocation5 + $0x180] sm:$0xff]
    %v1028 = vld [vmem:[#allocation5 + $0x188] sm:$0xff]
    %v1029 = vld [vmem:[#allocation5 + $0x190] sm:$0xff]
    %v1030 = vld [vmem:[#allocation5 + $0x198] sm:$0xff]
    %v1031 = vld [vmem:[#allocation5 + $0x1a0] sm:$0xff]
    %v1032 = vld [vmem:[#allocation5 + $0x1a8] sm:$0xff]
    %v1033 = vld [vmem:[#allocation5 + $0x1b0] sm:$0xff]
    %v1034 = vld [vmem:[#allocation5 + $0x1b8] sm:$0xff]
    %v1035 = vld [vmem:[#allocation5 + $0x1c0] sm:$0xff]
    %v1036 = vld [vmem:[#allocation5 + $0x1c8] sm:$0xff]
    %v1037 = vld [vmem:[#allocation5 + $0x1d0] sm:$0xff]
    %v1038 = vld [vmem:[#allocation5 + $0x1d8] sm:$0xff]
    %v1039 = vld [vmem:[#allocation5 + $0x1e0] sm:$0xff]
    %v1040 = vld [vmem:[#allocation5 + $0x1e8] sm:$0xff]
    %v1041 = vld [vmem:[#allocation5 + $0x1f0] sm:$0xff]
    %v1042 = vld [vmem:[#allocation5 + $0x1f8] sm:$0xff]
    %v1044 = vlaneseq
    %v1045 = vshrl.u32 %v1044, 7
    %v1046 = vsub.s32 0, %v1045
    %v1047 = vrot.slane %v970, %v1046
    %v1048 = vlaneseq
    %v1049 = vshrl.u32 %v1048, 7
    %v1050 = vsub.s32 1, %v1049
    %v1051 = vrot.slane %v970, %v1050
    %v1118 = vunpack.c.l.b16 %v979
    %v1119 = vunpack.c.h.b16 %v979
    %v1120 = vunpack.c.l.b16 %v980
    %v1121 = vunpack.c.h.b16 %v980
    %v1122 = vunpack.c.l.b16 %v981
    %v1123 = vunpack.c.h.b16 %v981
    %v1124 = vunpack.c.l.b16 %v982
    %v1125 = vunpack.c.h.b16 %v982
    %v1126 = vunpack.c.l.b16 %v983
    %v1127 = vunpack.c.h.b16 %v983
    %v1128 = vunpack.c.l.b16 %v984
    %v1129 = vunpack.c.h.b16 %v984
    %v1130 = vunpack.c.l.b16 %v985
    %v1131 = vunpack.c.h.b16 %v985
    %v1132 = vunpack.c.l.b16 %v986
    %v1133 = vunpack.c.h.b16 %v986
    %v1134 = vunpack.c.l.b16 %v987
    %v1135 = vunpack.c.h.b16 %v987
    %v1136 = vunpack.c.l.b16 %v988
    %v1137 = vunpack.c.h.b16 %v988
    %v1138 = vunpack.c.l.b16 %v989
    %v1139 = vunpack.c.h.b16 %v989
    %v1140 = vunpack.c.l.b16 %v990
    %v1141 = vunpack.c.h.b16 %v990
    %v1142 = vunpack.c.l.b16 %v991
    %v1143 = vunpack.c.h.b16 %v991
    %v1144 = vunpack.c.l.b16 %v992
    %v1145 = vunpack.c.h.b16 %v992
    %v1146 = vunpack.c.l.b16 %v993
    %v1147 = vunpack.c.h.b16 %v993
    %v1148 = vunpack.c.l.b16 %v994
    %v1149 = vunpack.c.h.b16 %v994
    %v1150 = vunpack.c.l.b16 %v995
    %v1151 = vunpack.c.h.b16 %v995
    %v1152 = vunpack.c.l.b16 %v996
    %v1153 = vunpack.c.h.b16 %v996
    %v1154 = vunpack.c.l.b16 %v997
    %v1155 = vunpack.c.h.b16 %v997
    %v1156 = vunpack.c.l.b16 %v998
    %v1157 = vunpack.c.h.b16 %v998
    %v1158 = vunpack.c.l.b16 %v999
    %v1159 = vunpack.c.h.b16 %v999
    %v1160 = vunpack.c.l.b16 %v1000
    %v1161 = vunpack.c.h.b16 %v1000
    %v1162 = vunpack.c.l.b16 %v1001
    %v1163 = vunpack.c.h.b16 %v1001
    %v1164 = vunpack.c.l.b16 %v1002
    %v1165 = vunpack.c.h.b16 %v1002
    %v1166 = vunpack.c.l.b16 %v1003
    %v1167 = vunpack.c.h.b16 %v1003
    %v1168 = vunpack.c.l.b16 %v1004
    %v1169 = vunpack.c.h.b16 %v1004
    %v1170 = vunpack.c.l.b16 %v1005
    %v1171 = vunpack.c.h.b16 %v1005
    %v1172 = vunpack.c.l.b16 %v1006
    %v1173 = vunpack.c.h.b16 %v1006
    %v1174 = vunpack.c.l.b16 %v1007
    %v1175 = vunpack.c.h.b16 %v1007
    %v1176 = vunpack.c.l.b16 %v1008
    %v1177 = vunpack.c.h.b16 %v1008
    %v1178 = vunpack.c.l.b16 %v1009
    %v1179 = vunpack.c.h.b16 %v1009
    %v1180 = vunpack.c.l.b16 %v1010
    %v1181 = vunpack.c.h.b16 %v1010
    %v1182 = vunpack.c.l.b16 %v1011
    %v1183 = vunpack.c.h.b16 %v1011
    %v1184 = vunpack.c.l.b16 %v1012
    %v1185 = vunpack.c.h.b16 %v1012
    %v1186 = vunpack.c.l.b16 %v1013
    %v1187 = vunpack.c.h.b16 %v1013
    %v1188 = vunpack.c.l.b16 %v1014
    %v1189 = vunpack.c.h.b16 %v1014
    %v1190 = vunpack.c.l.b16 %v1015
    %v1191 = vunpack.c.h.b16 %v1015
    %v1192 = vunpack.c.l.b16 %v1016
    %v1193 = vunpack.c.h.b16 %v1016
    %v1194 = vunpack.c.l.b16 %v1017
    %v1195 = vunpack.c.h.b16 %v1017
    %v1196 = vunpack.c.l.b16 %v1018
    %v1197 = vunpack.c.h.b16 %v1018
    %v1198 = vunpack.c.l.b16 %v1019
    %v1199 = vunpack.c.h.b16 %v1019
    %v1200 = vunpack.c.l.b16 %v1020
    %v1201 = vunpack.c.h.b16 %v1020
    %v1202 = vunpack.c.l.b16 %v1021
    %v1203 = vunpack.c.h.b16 %v1021
    %v1204 = vunpack.c.l.b16 %v1022
    %v1205 = vunpack.c.h.b16 %v1022
    %v1206 = vunpack.c.l.b16 %v1023
    %v1207 = vunpack.c.h.b16 %v1023
    %v1208 = vunpack.c.l.b16 %v1024
    %v1209 = vunpack.c.h.b16 %v1024
    %v1210 = vunpack.c.l.b16 %v1025
    %v1211 = vunpack.c.h.b16 %v1025
    %v1212 = vunpack.c.l.b16 %v1026
    %v1213 = vunpack.c.h.b16 %v1026
    %v1214 = vunpack.c.l.b16 %v1027
    %v1215 = vunpack.c.h.b16 %v1027
    %v1216 = vunpack.c.l.b16 %v1028
    %v1217 = vunpack.c.h.b16 %v1028
    %v1218 = vunpack.c.l.b16 %v1029
    %v1219 = vunpack.c.h.b16 %v1029
    %v1220 = vunpack.c.l.b16 %v1030
    %v1221 = vunpack.c.h.b16 %v1030
    %v1222 = vunpack.c.l.b16 %v1031
    %v1223 = vunpack.c.h.b16 %v1031
    %v1224 = vunpack.c.l.b16 %v1032
    %v1225 = vunpack.c.h.b16 %v1032
    %v1226 = vunpack.c.l.b16 %v1033
    %v1227 = vunpack.c.h.b16 %v1033
    %v1228 = vunpack.c.l.b16 %v1034
    %v1229 = vunpack.c.h.b16 %v1034
    %v1230 = vunpack.c.l.b16 %v1035
    %v1231 = vunpack.c.h.b16 %v1035
    %v1232 = vunpack.c.l.b16 %v1036
    %v1233 = vunpack.c.h.b16 %v1036
    %v1234 = vunpack.c.l.b16 %v1037
    %v1235 = vunpack.c.h.b16 %v1037
    %v1236 = vunpack.c.l.b16 %v1038
    %v1237 = vunpack.c.h.b16 %v1038
    %v1238 = vunpack.c.l.b16 %v1039
    %v1239 = vunpack.c.h.b16 %v1039
    %v1240 = vunpack.c.l.b16 %v1040
    %v1241 = vunpack.c.h.b16 %v1040
    %v1242 = vunpack.c.l.b16 %v1041
    %v1243 = vunpack.c.h.b16 %v1041
    %v1244 = vunpack.c.l.b16 %v1042
    %v1245 = vunpack.c.h.b16 %v1042
    %v1246 = vpack.c.b16 %v1120, %v1118
    %v1247 = vpack.c.b16 %v1121, %v1119
    %v1248 = vpack.c.b16 %v1124, %v1122
    %v1249 = vpack.c.b16 %v1125, %v1123
    %v1250 = vpack.c.b16 %v1128, %v1126
    %v1251 = vpack.c.b16 %v1129, %v1127
    %v1252 = vpack.c.b16 %v1132, %v1130
    %v1253 = vpack.c.b16 %v1133, %v1131
    %v1254 = vpack.c.b16 %v1136, %v1134
    %v1255 = vpack.c.b16 %v1137, %v1135
    %v1256 = vpack.c.b16 %v1140, %v1138
    %v1257 = vpack.c.b16 %v1141, %v1139
    %v1258 = vpack.c.b16 %v1144, %v1142
    %v1259 = vpack.c.b16 %v1145, %v1143
    %v1260 = vpack.c.b16 %v1148, %v1146
    %v1261 = vpack.c.b16 %v1149, %v1147
    %v1262 = vpack.c.b16 %v1152, %v1150
    %v1263 = vpack.c.b16 %v1153, %v1151
    %v1264 = vpack.c.b16 %v1156, %v1154
    %v1265 = vpack.c.b16 %v1157, %v1155
    %v1266 = vpack.c.b16 %v1160, %v1158
    %v1267 = vpack.c.b16 %v1161, %v1159
    %v1268 = vpack.c.b16 %v1164, %v1162
    %v1269 = vpack.c.b16 %v1165, %v1163
    %v1270 = vpack.c.b16 %v1168, %v1166
    %v1271 = vpack.c.b16 %v1169, %v1167
    %v1272 = vpack.c.b16 %v1172, %v1170
    %v1273 = vpack.c.b16 %v1173, %v1171
    %v1274 = vpack.c.b16 %v1176, %v1174
    %v1275 = vpack.c.b16 %v1177, %v1175
    %v1276 = vpack.c.b16 %v1180, %v1178
    %v1277 = vpack.c.b16 %v1181, %v1179
    %v1278 = vpack.c.b16 %v1184, %v1182
    %v1279 = vpack.c.b16 %v1185, %v1183
    %v1280 = vpack.c.b16 %v1188, %v1186
    %v1281 = vpack.c.b16 %v1189, %v1187
    %v1282 = vpack.c.b16 %v1192, %v1190
    %v1283 = vpack.c.b16 %v1193, %v1191
    %v1284 = vpack.c.b16 %v1196, %v1194
    %v1285 = vpack.c.b16 %v1197, %v1195
    %v1286 = vpack.c.b16 %v1200, %v1198
    %v1287 = vpack.c.b16 %v1201, %v1199
    %v1288 = vpack.c.b16 %v1204, %v1202
    %v1289 = vpack.c.b16 %v1205, %v1203
    %v1290 = vpack.c.b16 %v1208, %v1206
    %v1291 = vpack.c.b16 %v1209, %v1207
    %v1292 = vpack.c.b16 %v1212, %v1210
    %v1293 = vpack.c.b16 %v1213, %v1211
    %v1294 = vpack.c.b16 %v1216, %v1214
    %v1295 = vpack.c.b16 %v1217, %v1215
    %v1296 = vpack.c.b16 %v1220, %v1218
    %v1297 = vpack.c.b16 %v1221, %v1219
    %v1298 = vpack.c.b16 %v1224, %v1222
    %v1299 = vpack.c.b16 %v1225, %v1223
    %v1300 = vpack.c.b16 %v1228, %v1226
    %v1301 = vpack.c.b16 %v1229, %v1227
    %v1302 = vpack.c.b16 %v1232, %v1230
    %v1303 = vpack.c.b16 %v1233, %v1231
    %v1304 = vpack.c.b16 %v1236, %v1234
    %v1305 = vpack.c.b16 %v1237, %v1235
    %v1306 = vpack.c.b16 %v1240, %v1238
    %v1307 = vpack.c.b16 %v1241, %v1239
    %v1308 = vpack.c.b16 %v1244, %v1242
    %v1309 = vpack.c.b16 %v1245, %v1243
    %1374 = vmatprep.subr.bf16.mxu0 %v1247
    %1375 = vmatpush1.bf16.msra.mxu0 %v1246
    %1376 = vmatprep.subr.bf16.mxu0 %v1249
    %1377 = vmatpush1.bf16.msra.mxu0 %v1248
    %1378 = vmatprep.subr.bf16.mxu0 %v1251
    %1379 = vmatpush1.bf16.msra.mxu0 %v1250
    %1380 = vmatprep.subr.bf16.mxu0 %v1253
    %1381 = vmatpush1.bf16.msra.mxu0 %v1252
    %1382 = vmatprep.subr.bf16.mxu0 %v1255
    %1383 = vmatpush1.bf16.msra.mxu0 %v1254
    %1384 = vmatprep.subr.bf16.mxu0 %v1257
    %1385 = vmatpush1.bf16.msra.mxu0 %v1256
    %1386 = vmatprep.subr.bf16.mxu0 %v1259
    %1387 = vmatpush1.bf16.msra.mxu0 %v1258
    %1388 = vmatprep.subr.bf16.mxu0 %v1261
    %1389 = vmatpush1.bf16.msra.mxu0 %v1260
    %1390 = vmatprep.subr.bf16.mxu0 %v1263
    %1391 = vmatpush1.bf16.msra.mxu0 %v1262
    %1392 = vmatprep.subr.bf16.mxu0 %v1265
    %1393 = vmatpush1.bf16.msra.mxu0 %v1264
    %1394 = vmatprep.subr.bf16.mxu0 %v1267
    %1395 = vmatpush1.bf16.msra.mxu0 %v1266
    %1396 = vmatprep.subr.bf16.mxu0 %v1269
    %1397 = vmatpush1.bf16.msra.mxu0 %v1268
    %1398 = vmatprep.subr.bf16.mxu0 %v1271
    %1399 = vmatpush1.bf16.msra.mxu0 %v1270
    %1400 = vmatprep.subr.bf16.mxu0 %v1273
    %1401 = vmatpush1.bf16.msra.mxu0 %v1272
    %1402 = vmatprep.subr.bf16.mxu0 %v1275
    %1403 = vmatpush1.bf16.msra.mxu0 %v1274
    %1404 = vmatprep.subr.bf16.mxu0 %v1277
    %1405 = vmatpush1.bf16.msra.mxu0 %v1276
    %1406 = vmatprep.mubr.bf16.mxu0 %v976
    %1407 = vmatmul.mubr.bf16.gmra.mrb[0].mxu0 %v975
    %v1408 = vpop.f32.mrb[0].mxu0
    %v1409 = vadd.f32 %v1047, %v1408
    %v1410 = vpop.f32.mrb[0].mxu0
    %v1411 = vadd.f32 %v1051, %v1410
    %v1412 = vpop.f32.mrb[0].mxu0
    %v1413 = vpop.f32.mrb[0].mxu0
    %1414 = vdwg.mxu0
    %1415 = vmatprep.subr.bf16.mxu0 %v1279
    %1416 = vmatpush1.bf16.msra.mxu0 %v1278
    %1417 = vmatprep.subr.bf16.mxu0 %v1281
    %1418 = vmatpush1.bf16.msra.mxu0 %v1280
    %1419 = vmatprep.subr.bf16.mxu0 %v1283
    %1420 = vmatpush1.bf16.msra.mxu0 %v1282
    %1421 = vmatprep.subr.bf16.mxu0 %v1285
    %1422 = vmatpush1.bf16.msra.mxu0 %v1284
    %1423 = vmatprep.subr.bf16.mxu0 %v1287
    %1424 = vmatpush1.bf16.msra.mxu0 %v1286
    %1425 = vmatprep.subr.bf16.mxu0 %v1289
    %1426 = vmatpush1.bf16.msra.mxu0 %v1288
    %1427 = vmatprep.subr.bf16.mxu0 %v1291
    %1428 = vmatpush1.bf16.msra.mxu0 %v1290
    %1429 = vmatprep.subr.bf16.mxu0 %v1293
    %1430 = vmatpush1.bf16.msra.mxu0 %v1292
    %1431 = vmatprep.subr.bf16.mxu0 %v1295
    %1432 = vmatpush1.bf16.msra.mxu0 %v1294
    %1433 = vmatprep.subr.bf16.mxu0 %v1297
    %1434 = vmatpush1.bf16.msra.mxu0 %v1296
    %1435 = vmatprep.subr.bf16.mxu0 %v1299
    %1436 = vmatpush1.bf16.msra.mxu0 %v1298
    %1437 = vmatprep.subr.bf16.mxu0 %v1301
    %1438 = vmatpush1.bf16.msra.mxu0 %v1300
    %1439 = vmatprep.subr.bf16.mxu0 %v1303
    %1440 = vmatpush1.bf16.msra.mxu0 %v1302
    %1441 = vmatprep.subr.bf16.mxu0 %v1305
    %1442 = vmatpush1.bf16.msra.mxu0 %v1304
    %1443 = vmatprep.subr.bf16.mxu0 %v1307
    %1444 = vmatpush1.bf16.msra.mxu0 %v1306
    %1445 = vmatprep.subr.bf16.mxu0 %v1309
    %1446 = vmatpush1.bf16.msra.mxu0 %v1308
    %1447 = vmatprep.mubr.bf16.mxu0 %v978
    %1448 = vmatmul.mubr.bf16.gmra.mrb[0].mxu0 %v977
    %v1449 = vpop.f32.mrb[0].mxu0
    %v1450 = vadd.f32 %v1409, %v1449
    %v1451 = vpop.f32.mrb[0].mxu0
    %v1452 = vadd.f32 %v1411, %v1451
    %v1453 = vpop.f32.mrb[0].mxu0
    %v1454 = vpop.f32.mrb[0].mxu0
    %1455 = vdwg.mxu0
    %v1456 = vmax.f32 %v1450, 0.0
    %v1457 = vmax.f32 %v1452, 0.0
    %v1458 = vrot.slane %v1456, 4
    %v1459 = vadd.f32 %v1456, %v1458
    %v1460 = vrot.slane %v1459, 2
    %v1461 = vadd.f32 %v1459, %v1460
    %v1462 = vrot.slane %v1461, 1
    %v1463 = vadd.f32 %v1461, %v1462
    %v1464 = vrot.slane %v1457, 4
    %v1465 = vadd.f32 %v1457, %v1464
    %v1466 = vrot.slane %v1465, 2
    %v1467 = vadd.f32 %v1465, %v1466
    %v1468 = vrot.slane %v1467, 1
    %v1469 = vadd.f32 %v1467, %v1468
    %v1470 = vmul.f32 %v1463, %v187
    %v1471 = vmul.f32 %v1469, %v187
    %v1472 = vmul.f32 %v1456, %v1456
    %v1473 = vmul.f32 %v1457, %v1457
    %v1474 = vrot.slane %v1472, 4
    %v1475 = vadd.f32 %v1472, %v1474
    %v1476 = vrot.slane %v1475, 2
    %v1477 = vadd.f32 %v1475, %v1476
    %v1478 = vrot.slane %v1477, 1
    %v1479 = vadd.f32 %v1477, %v1478
    %v1480 = vrot.slane %v1473, 4
    %v1481 = vadd.f32 %v1473, %v1480
    %v1482 = vrot.slane %v1481, 2
    %v1483 = vadd.f32 %v1481, %v1482
    %v1484 = vrot.slane %v1483, 1
    %v1485 = vadd.f32 %v1483, %v1484
    %v1486 = vmul.f32 %v1479, %v187
    %v1487 = vmul.f32 %v1485, %v187
    %v1488 = vmul.f32 %v1470, %v1470
    %v1489 = vmul.f32 %v1471, %v1471
    %v1490 = vsub.f32 %v1486, %v1488
    %v1491 = vsub.f32 %v1487, %v1489
    %v1492 = vadd.f32 %v1490, 1e-05
    %v1493 = vadd.f32 %v1491, 1e-05
    %v1494 = vrsqrt.pop %v1492
    %v1495 = vrsqrt.pop %v1493
    %v1498 = vcombine.low %v1494, %v1495
    %v1500 = vunpack.c.l.s4 1966171168
    %v1501 = vunpack.c.0.s8 %v1500
    %v1502 = vlaneseq
    %v1503 = vshrl.u32 %v1502, 7
    %v1504 = vsub.s32 %v1501, %v1503
    %v1505 = vrot.slane %v1498, %v1504
    %v1507 = vunpack.c.l.s4 1966171168
    %v1508 = vunpack.c.0.s8 %v1507
    %v1509 = vlaneseq
    %v1510 = vshrl.u32 %v1509, 7
    %v1511 = vsub.s32 %v1508, %v1510
    %v1512 = vrot.slane %v1505, %v1511
    %v1514 = vmul.f32 %v972, %v1512
    %v1516 = vlaneseq
    %v1517 = vshrl.u32 %v1516, 7
    %v1518 = vsub.s32 0, %v1517
    %v1519 = vrot.slane %v1514, %v1518
    %v1520 = vlaneseq
    %v1521 = vshrl.u32 %v1520, 7
    %v1522 = vsub.s32 1, %v1521
    %v1523 = vrot.slane %v1514, %v1522
    %v1526 = vmul.f32 %v1470, %v1519
    %v1527 = vmul.f32 %v1471, %v1523
    %v1530 = vcombine.low %v1526, %v1527
    %v1532 = vunpack.c.l.s4 1966171168
    %v1533 = vunpack.c.0.s8 %v1532
    %v1534 = vlaneseq
    %v1535 = vshrl.u32 %v1534, 7
    %v1536 = vsub.s32 %v1533, %v1535
    %v1537 = vrot.slane %v1530, %v1536
    %v1539 = vunpack.c.l.s4 1966171168
    %v1540 = vunpack.c.0.s8 %v1539
    %v1541 = vlaneseq
    %v1542 = vshrl.u32 %v1541, 7
    %v1543 = vsub.s32 %v1540, %v1542
    %v1544 = vrot.slane %v1537, %v1543
    %v1546 = vsub.f32 %v974, %v1544
    %v1547 = vmul.f32 %v1456, %v1519
    %v1548 = vmul.f32 %v1457, %v1523
    %v1550 = vlaneseq
    %v1551 = vshrl.u32 %v1550, 7
    %v1552 = vsub.s32 0, %v1551
    %v1553 = vrot.slane %v1546, %v1552
    %v1554 = vlaneseq
    %v1555 = vshrl.u32 %v1554, 7
    %v1556 = vsub.s32 1, %v1555
    %v1557 = vrot.slane %v1546, %v1556
    %v1560 = vadd.f32 %v1547, %v1553
    %v1561 = vadd.f32 %v1548, %v1557
    %v1562 = vld [vmem:[%s7 + $0x21] ss:$0 sm:$0xff]
    %v1563 = vld [vmem:[%s7 + $0x22] ss:$0 sm:$0xff]
    %v1564 = vld [vmem:[%s7 + $0x23] ss:$0 sm:$0xff]
    %v1565 = vpack.c.bf16 %v1560, %v1560
    %v1566 = vpack.c.bf16 %v1561, %v1561
    %v1567 = vld [vmem:[#allocation7] sm:$0xf]
    %v1568 = vld [vmem:[#allocation7 + $0x4] sm:$0xf]
    %v1569 = vld [vmem:[#allocation7 + $0x8] sm:$0xf]
    %v1570 = vld [vmem:[#allocation7 + $0xc] sm:$0xf]
    %v1571 = vld [vmem:[#allocation7 + $0x10] sm:$0xf]
    %v1572 = vld [vmem:[#allocation7 + $0x14] sm:$0xf]
    %v1573 = vld [vmem:[#allocation7 + $0x18] sm:$0xf]
    %v1574 = vld [vmem:[#allocation7 + $0x1c] sm:$0xf]
    %v1575 = vld [vmem:[#allocation7 + $0x20] sm:$0xf]
    %v1576 = vld [vmem:[#allocation7 + $0x24] sm:$0xf]
    %v1577 = vld [vmem:[#allocation7 + $0x28] sm:$0xf]
    %v1578 = vld [vmem:[#allocation7 + $0x2c] sm:$0xf]
    %v1579 = vld [vmem:[#allocation7 + $0x30] sm:$0xf]
    %v1580 = vld [vmem:[#allocation7 + $0x34] sm:$0xf]
    %v1581 = vld [vmem:[#allocation7 + $0x38] sm:$0xf]
    %v1582 = vld [vmem:[#allocation7 + $0x3c] sm:$0xf]
    %v1583 = vld [vmem:[#allocation7 + $0x40] sm:$0xf]
    %v1584 = vld [vmem:[#allocation7 + $0x44] sm:$0xf]
    %v1585 = vld [vmem:[#allocation7 + $0x48] sm:$0xf]
    %v1586 = vld [vmem:[#allocation7 + $0x4c] sm:$0xf]
    %v1587 = vld [vmem:[#allocation7 + $0x50] sm:$0xf]
    %v1588 = vld [vmem:[#allocation7 + $0x54] sm:$0xf]
    %v1589 = vld [vmem:[#allocation7 + $0x58] sm:$0xf]
    %v1590 = vld [vmem:[#allocation7 + $0x5c] sm:$0xf]
    %v1591 = vld [vmem:[#allocation7 + $0x60] sm:$0xf]
    %v1592 = vld [vmem:[#allocation7 + $0x64] sm:$0xf]
    %v1593 = vld [vmem:[#allocation7 + $0x68] sm:$0xf]
    %v1594 = vld [vmem:[#allocation7 + $0x6c] sm:$0xf]
    %v1595 = vld [vmem:[#allocation7 + $0x70] sm:$0xf]
    %v1596 = vld [vmem:[#allocation7 + $0x74] sm:$0xf]
    %v1597 = vld [vmem:[#allocation7 + $0x78] sm:$0xf]
    %v1598 = vld [vmem:[#allocation7 + $0x7c] sm:$0xf]
    %v1631 = vunpack.c.l.b16 %v1567
    %v1632 = vunpack.c.l.b16 %v1568
    %v1633 = vunpack.c.l.b16 %v1569
    %v1634 = vunpack.c.l.b16 %v1570
    %v1635 = vunpack.c.l.b16 %v1571
    %v1636 = vunpack.c.l.b16 %v1572
    %v1637 = vunpack.c.l.b16 %v1573
    %v1638 = vunpack.c.l.b16 %v1574
    %v1639 = vunpack.c.l.b16 %v1575
    %v1640 = vunpack.c.l.b16 %v1576
    %v1641 = vunpack.c.l.b16 %v1577
    %v1642 = vunpack.c.l.b16 %v1578
    %v1643 = vunpack.c.l.b16 %v1579
    %v1644 = vunpack.c.l.b16 %v1580
    %v1645 = vunpack.c.l.b16 %v1581
    %v1646 = vunpack.c.l.b16 %v1582
    %v1647 = vunpack.c.l.b16 %v1583
    %v1648 = vunpack.c.l.b16 %v1584
    %v1649 = vunpack.c.l.b16 %v1585
    %v1650 = vunpack.c.l.b16 %v1586
    %v1651 = vunpack.c.l.b16 %v1587
    %v1652 = vunpack.c.l.b16 %v1588
    %v1653 = vunpack.c.l.b16 %v1589
    %v1654 = vunpack.c.l.b16 %v1590
    %v1655 = vunpack.c.l.b16 %v1591
    %v1656 = vunpack.c.l.b16 %v1592
    %v1657 = vunpack.c.l.b16 %v1593
    %v1658 = vunpack.c.l.b16 %v1594
    %v1659 = vunpack.c.l.b16 %v1595
    %v1660 = vunpack.c.l.b16 %v1596
    %v1661 = vunpack.c.l.b16 %v1597
    %v1662 = vunpack.c.l.b16 %v1598
    %v1663 = vpack.c.b16 %v1632, %v1631
    %v1664 = vpack.c.b16 %v1634, %v1633
    %v1665 = vpack.c.b16 %v1636, %v1635
    %v1666 = vpack.c.b16 %v1638, %v1637
    %v1667 = vpack.c.b16 %v1640, %v1639
    %v1668 = vpack.c.b16 %v1642, %v1641
    %v1669 = vpack.c.b16 %v1644, %v1643
    %v1670 = vpack.c.b16 %v1646, %v1645
    %v1671 = vpack.c.b16 %v1648, %v1647
    %v1672 = vpack.c.b16 %v1650, %v1649
    %v1673 = vpack.c.b16 %v1652, %v1651
    %v1674 = vpack.c.b16 %v1654, %v1653
    %v1675 = vpack.c.b16 %v1656, %v1655
    %v1676 = vpack.c.b16 %v1658, %v1657
    %v1677 = vpack.c.b16 %v1660, %v1659
    %v1678 = vpack.c.b16 %v1662, %v1661
    %1695 = vmatprep.subr.bf16.mxu0 0
    %1696 = vmatpush1.bf16.msra.mxu0 %v1663
    %1697 = vmatprep.subr.bf16.mxu0 0
    %1698 = vmatpush1.bf16.msra.mxu0 %v1664
    %1699 = vmatprep.subr.bf16.mxu0 0
    %1700 = vmatpush1.bf16.msra.mxu0 %v1665
    %1701 = vmatprep.subr.bf16.mxu0 0
    %1702 = vmatpush1.bf16.msra.mxu0 %v1666
    %1703 = vmatprep.subr.bf16.mxu0 0
    %1704 = vmatpush1.bf16.msra.mxu0 %v1667
    %1705 = vmatprep.subr.bf16.mxu0 0
    %1706 = vmatpush1.bf16.msra.mxu0 %v1668
    %1707 = vmatprep.subr.bf16.mxu0 0
    %1708 = vmatpush1.bf16.msra.mxu0 %v1669
    %1709 = vmatprep.subr.bf16.mxu0 0
    %1710 = vmatpush1.bf16.msra.mxu0 %v1670
    %1711 = vmatprep.subr.bf16.mxu0 0
    %1712 = vmatpush1.bf16.msra.mxu0 %v1671
    %1713 = vmatprep.subr.bf16.mxu0 0
    %1714 = vmatpush1.bf16.msra.mxu0 %v1672
    %1715 = vmatprep.subr.bf16.mxu0 0
    %1716 = vmatpush1.bf16.msra.mxu0 %v1673
    %1717 = vmatprep.subr.bf16.mxu0 0
    %1718 = vmatpush1.bf16.msra.mxu0 %v1674
    %1719 = vmatprep.subr.bf16.mxu0 0
    %1720 = vmatpush1.bf16.msra.mxu0 %v1675
    %1721 = vmatprep.subr.bf16.mxu0 0
    %1722 = vmatpush1.bf16.msra.mxu0 %v1676
    %1723 = vmatprep.subr.bf16.mxu0 0
    %1724 = vmatpush1.bf16.msra.mxu0 %v1677
    %1725 = vmatprep.subr.bf16.mxu0 0
    %1726 = vmatpush1.bf16.msra.mxu0 %v1678
    %1727 = vmatprep.mubr.bf16.mxu0 %v1566
    %1728 = vmatmul.mubr.bf16.gmra.mrb[0].mxu0 %v1565
    %v1729 = vpop.f32.mrb[0].mxu0
    %v1730 = vadd.f32 %v1562, %v1729
    %v1731 = vpop.f32.mrb[0].mxu0
    %v1732 = vpop.f32.mrb[0].mxu0
    %v1733 = vpop.f32.mrb[0].mxu0
    %1734 = vdwg.mxu0
    %v1735 = vmax.f32 %v1730, 0.0
    %v1736 = vrot.slane %v1735, 4
    %v1737 = vadd.f32 %v1735, %v1736
    %v1738 = vrot.slane %v1737, 2
    %v1739 = vadd.f32 %v1737, %v1738
    %v1740 = vrot.slane %v1739, 1
    %v1741 = vadd.f32 %v1739, %v1740
    %v1742 = vmul.f32 %v1741, %v187
    %v1743 = vmul.f32 %v1735, %v1735
    %v1744 = vrot.slane %v1743, 4
    %v1745 = vadd.f32 %v1743, %v1744
    %v1746 = vrot.slane %v1745, 2
    %v1747 = vadd.f32 %v1745, %v1746
    %v1748 = vrot.slane %v1747, 1
    %v1749 = vadd.f32 %v1747, %v1748
    %v1750 = vmul.f32 %v1749, %v187
    %v1751 = vmul.f32 %v1742, %v1742
    %v1752 = vsub.f32 %v1750, %v1751
    %v1753 = vadd.f32 %v1752, 1e-05
    %v1754 = vrsqrt.pop %v1753
    %v1755 = vmul.f32 %v1563, %v1754
    %v1756 = vmul.f32 %v1742, %v1755
    %v1757 = vsub.f32 %v1564, %v1756
    %v1758 = vmul.f32 %v1735, %v1755
    %v1759 = vadd.f32 %v1758, %v1757
    %v1760 = vld [vmem:[%s7 + $0x24] ss:$0 sm:$0xff]
    %v1761 = vld [vmem:[%s7 + $0x25] ss:$0 sm:$0xff]
    %v1762 = vld [vmem:[%s7 + $0x26] ss:$0 sm:$0xff]
    %v1763 = vpack.c.bf16 %v1759, %v1759
    %v1764 = vld [vmem:[%s5] sm:$0xf]
    %v1765 = vld [vmem:[%s5 + $0x4] sm:$0xf]
    %v1766 = vld [vmem:[%s5 + $0x8] sm:$0xf]
    %v1767 = vld [vmem:[%s5 + $0xc] sm:$0xf]
    %v1768 = vld [vmem:[%s5 + $0x10] sm:$0xf]
    %v1769 = vld [vmem:[%s5 + $0x14] sm:$0xf]
    %v1770 = vld [vmem:[%s5 + $0x18] sm:$0xf]
    %v1771 = vld [vmem:[%s5 + $0x1c] sm:$0xf]
    %v1772 = vld [vmem:[%s5 + $0x20] sm:$0xf]
    %v1773 = vld [vmem:[%s5 + $0x24] sm:$0xf]
    %v1774 = vld [vmem:[%s5 + $0x28] sm:$0xf]
    %v1775 = vld [vmem:[%s5 + $0x2c] sm:$0xf]
    %v1776 = vld [vmem:[%s5 + $0x30] sm:$0xf]
    %v1777 = vld [vmem:[%s5 + $0x34] sm:$0xf]
    %v1778 = vld [vmem:[%s5 + $0x38] sm:$0xf]
    %v1779 = vld [vmem:[%s5 + $0x3c] sm:$0xf]
    %v1796 = vunpack.c.l.b16 %v1764
    %v1797 = vunpack.c.l.b16 %v1765
    %v1798 = vunpack.c.l.b16 %v1766
    %v1799 = vunpack.c.l.b16 %v1767
    %v1800 = vunpack.c.l.b16 %v1768
    %v1801 = vunpack.c.l.b16 %v1769
    %v1802 = vunpack.c.l.b16 %v1770
    %v1803 = vunpack.c.l.b16 %v1771
    %v1804 = vunpack.c.l.b16 %v1772
    %v1805 = vunpack.c.l.b16 %v1773
    %v1806 = vunpack.c.l.b16 %v1774
    %v1807 = vunpack.c.l.b16 %v1775
    %v1808 = vunpack.c.l.b16 %v1776
    %v1809 = vunpack.c.l.b16 %v1777
    %v1810 = vunpack.c.l.b16 %v1778
    %v1811 = vunpack.c.l.b16 %v1779
    %v1812 = vpack.c.b16 %v1797, %v1796
    %v1813 = vpack.c.b16 %v1799, %v1798
    %v1814 = vpack.c.b16 %v1801, %v1800
    %v1815 = vpack.c.b16 %v1803, %v1802
    %v1816 = vpack.c.b16 %v1805, %v1804
    %v1817 = vpack.c.b16 %v1807, %v1806
    %v1818 = vpack.c.b16 %v1809, %v1808
    %v1819 = vpack.c.b16 %v1811, %v1810
    %1828 = vmatprep.subr.bf16.mxu0 0
    %1829 = vmatpush1.bf16.msra.mxu0 %v1812
    %1830 = vmatprep.subr.bf16.mxu0 0
    %1831 = vmatpush1.bf16.msra.mxu0 %v1813
    %1832 = vmatprep.subr.bf16.mxu0 0
    %1833 = vmatpush1.bf16.msra.mxu0 %v1814
    %1834 = vmatprep.subr.bf16.mxu0 0
    %1835 = vmatpush1.bf16.msra.mxu0 %v1815
    %1836 = vmatprep.subr.bf16.mxu0 0
    %1837 = vmatpush1.bf16.msra.mxu0 %v1816
    %1838 = vmatprep.subr.bf16.mxu0 0
    %1839 = vmatpush1.bf16.msra.mxu0 %v1817
    %1840 = vmatprep.subr.bf16.mxu0 0
    %1841 = vmatpush1.bf16.msra.mxu0 %v1818
    %1842 = vmatprep.subr.bf16.mxu0 0
    %1843 = vmatpush1.bf16.msra.mxu0 %v1819
    %1844 = vmatprep.subr.bf16.mxu0 0
    %1845 = vmatpush1.bf16.msra.mxu0 0
    %1846 = vmatprep.subr.bf16.mxu0 0
    %1847 = vmatpush1.bf16.msra.mxu0 0
    %1848 = vmatprep.subr.bf16.mxu0 0
    %1849 = vmatpush1.bf16.msra.mxu0 0
    %1850 = vmatprep.subr.bf16.mxu0 0
    %1851 = vmatpush1.bf16.msra.mxu0 0
    %1852 = vmatprep.subr.bf16.mxu0 0
    %1853 = vmatpush1.bf16.msra.mxu0 0
    %1854 = vmatprep.subr.bf16.mxu0 0
    %1855 = vmatpush1.bf16.msra.mxu0 0
    %1856 = vmatprep.subr.bf16.mxu0 0
    %1857 = vmatpush1.bf16.msra.mxu0 0
    %1858 = vmatprep.subr.bf16.mxu0 0
    %1859 = vmatpush1.bf16.msra.mxu0 0
    %1860 = vmatprep.mubr.bf16.mxu0 0
    %1861 = vmatmul.mubr.bf16.gmra.mrb[0].mxu0 %v1763
    %v1862 = vpop.f32.mrb[0].mxu0
    %v1863 = vadd.f32 %v1760, %v1862
    %v1864 = vpop.f32.mrb[0].mxu0
    %v1865 = vpop.f32.mrb[0].mxu0
    %v1866 = vpop.f32.mrb[0].mxu0
    %1867 = vdwg.mxu0
    %v1868 = vmax.f32 %v1863, 0.0
    %vm1869 = vcmask 523264
    %v1870 = vsel %vm1869, %v1868, 0.0
    %v1871 = vrot.slane %v1870, 4
    %v1872 = vadd.f32 %v1870, %v1871
    %v1873 = vrot.slane %v1872, 2
    %v1874 = vadd.f32 %v1872, %v1873
    %v1875 = vrot.slane %v1874, 1
    %v1876 = vadd.f32 %v1874, %v1875
    %v1877 = vmul.f32 %v1876, %v187
    %v1878 = vmul.f32 %v1868, %v1868
    %v1879 = vsel %vm1869, %v1878, 0.0
    %v1880 = vrot.slane %v1879, 4
    %v1881 = vadd.f32 %v1879, %v1880
    %v1882 = vrot.slane %v1881, 2
    %v1883 = vadd.f32 %v1881, %v1882
    %v1884 = vrot.slane %v1883, 1
    %v1885 = vadd.f32 %v1883, %v1884
    %v1886 = vmul.f32 %v1885, %v187
    %v1887 = vmul.f32 %v1877, %v1877
    %v1888 = vsub.f32 %v1886, %v1887
    %v1889 = vadd.f32 %v1888, 1e-05
    %v1890 = vrsqrt.pop %v1889
    %v1891 = vmul.f32 %v1761, %v1890
    %v1892 = vmul.f32 %v1877, %v1891
    %v1893 = vsub.f32 %v1762, %v1892
    %v1894 = vmul.f32 %v1868, %v1891
    %v1895 = vadd.f32 %v1894, %v1893
    %v1896 = vld [vmem:[%s7 + $0x27] ss:$0 sm:$0xff]
    %v1897 = vpack.c.bf16 %v1895, %v1895
    %v1898 = vld [vmem:[#allocation8] sm:$0xf]
    %v1899 = vld [vmem:[#allocation8 + $0x4] sm:$0xf]
    %v1900 = vld [vmem:[#allocation8 + $0x8] sm:$0xf]
    %v1901 = vld [vmem:[#allocation8 + $0xc] sm:$0xf]
    %v1902 = vld [vmem:[#allocation8 + $0x10] sm:$0xf]
    %v1903 = vld [vmem:[#allocation8 + $0x14] sm:$0xf]
    %v1904 = vld [vmem:[#allocation8 + $0x18] sm:$0xf]
    %v1905 = vld [vmem:[#allocation8 + $0x1c] sm:$0xf]
    %v1914 = vunpack.c.l.b16 %v1898
    %v1915 = vunpack.c.l.b16 %v1899
    %v1916 = vunpack.c.l.b16 %v1900
    %v1917 = vunpack.c.l.b16 %v1901
    %v1918 = vunpack.c.l.b16 %v1902
    %v1919 = vunpack.c.l.b16 %v1903
    %v1920 = vunpack.c.l.b16 %v1904
    %v1921 = vunpack.c.l.b16 %v1905
    %v1922 = vpack.c.b16 %v1915, %v1914
    %v1923 = vpack.c.b16 %v1917, %v1916
    %v1924 = vpack.c.b16 %v1919, %v1918
    %v1925 = vpack.c.b16 %v1921, %v1920
    %v1931 = vsel %vm1869, %v1897, 0
    %1933 = vmatprep.subr.bf16.mxu0 0
    %1934 = vmatpush1.bf16.msra.mxu0 %v1922
    %1935 = vmatprep.subr.bf16.mxu0 0
    %1936 = vmatpush1.bf16.msra.mxu0 %v1923
    %1937 = vmatprep.subr.bf16.mxu0 0
    %1938 = vmatpush1.bf16.msra.mxu0 %v1924
    %1939 = vmatprep.subr.bf16.mxu0 0
    %1940 = vmatpush1.bf16.msra.mxu0 %v1925
    %1941 = vmatprep.subr.bf16.mxu0 0
    %1942 = vmatpush1.bf16.msra.mxu0 0
    %1943 = vmatprep.subr.bf16.mxu0 0
    %1944 = vmatpush1.bf16.msra.mxu0 0
    %1945 = vmatprep.subr.bf16.mxu0 0
    %1946 = vmatpush1.bf16.msra.mxu0 0
    %1947 = vmatprep.subr.bf16.mxu0 0
    %1948 = vmatpush1.bf16.msra.mxu0 0
    %1949 = vmatprep.subr.bf16.mxu0 0
    %1950 = vmatpush1.bf16.msra.mxu0 0
    %1951 = vmatprep.subr.bf16.mxu0 0
    %1952 = vmatpush1.bf16.msra.mxu0 0
    %1953 = vmatprep.subr.bf16.mxu0 0
    %1954 = vmatpush1.bf16.msra.mxu0 0
    %1955 = vmatprep.subr.bf16.mxu0 0
    %1956 = vmatpush1.bf16.msra.mxu0 0
    %1957 = vmatprep.subr.bf16.mxu0 0
    %1958 = vmatpush1.bf16.msra.mxu0 0
    %1959 = vmatprep.subr.bf16.mxu0 0
    %1960 = vmatpush1.bf16.msra.mxu0 0
    %1961 = vmatprep.subr.bf16.mxu0 0
    %1962 = vmatpush1.bf16.msra.mxu0 0
    %1963 = vmatprep.subr.bf16.mxu0 0
    %1964 = vmatpush1.bf16.msra.mxu0 0
    %1965 = vmatprep.mubr.bf16.mxu0 0
    %1966 = vmatmul.mubr.bf16.gmra.mrb[0].mxu0 %v1931
    %v1967 = vpop.f32.mrb[0].mxu0
    %v1968 = vadd.f32 %v1896, %v1967
    %v1969 = vpop.f32.mrb[0].mxu0
    %v1970 = vpop.f32.mrb[0].mxu0
    %v1971 = vpop.f32.mrb[0].mxu0
    %1972 = vdwg.mxu0
    %1973 = vst [vmem:[#allocation10] sm:$0xff] %v1968
    // Predicated region
    $region50: #{tpu_custom_call.1} parent=1 // pred_check
      _
    $region51: #{tpu_custom_call.1} parent=1 // pred_check_branch
      %1975 = sbr.rel (0) target = $region53
    $region52: #{tpu_custom_call.1} parent=1 // pred_region
      %s1977 = ssub.s32 128, 128
      %1978 = vsyncadd [#allocation4], %s1977
      %s1980 = sshll.u32 [#allocation10], 4
      %s1981 = int_to_ptr.vmem [resolvable:$true] %s1980
      %1983 = dma.vmem_to_hbm [thread:$0]  %s1981, 128, %s8, [#allocation4]
    $region53: #{tpu_custom_call.1} parent=1 // pred_fallthru
      _
    // Predicated region
    $region54: #{tpu_custom_call.1} parent=1 // pred_check
      _
    $region55: #{tpu_custom_call.1} parent=1 // pred_check_branch
      %1985 = sbr.rel (0) target = $region57
    $region56: #{tpu_custom_call.1} parent=1 // pred_region
      %1986 = dma.done [#allocation4], 128
    $region57: #{tpu_custom_call.1} parent=1 // pred_fallthru
      _
    %1987 = vsyncpa [#allocation3], 1
    %1988 = vsyncpa [#allocation6], 1
    %1989 = vsyncpa [#allocation9], 1
    %1990 = vsyncpa [#allocation4], 1

</llo_original>
